<compile_context>
chip_gen: v5e
topology: v5e:2x2
jax: 0.10.0
libtpu: 0.0.40
codegen_flags: <defaults>
</compile_context>

<pallas_src>
import jax
import jax.numpy as jnp
from jax import lax
from jax.experimental import pallas as pl
from jax.experimental.pallas import tpu as pltpu

HIDDEN = 8                      # hidden width of each tiny MLP
PER_BRANCH = 3 * HIDDEN + 1     # packed params per branch: w1(8)|b1(8)|w2(8)|b2(1)
N_PARAMS = 3 * PER_BRANCH       # 75
WIDTH = 512                     # lane-dense last dim (multiple of 128)
MAX_BLOCK_ROWS = 512            # 512x512 f32 = 1 MiB per array per block (8 MiB/step dbl-buffered)
ROW_ALIGN = 16                  # block rows are multiples of this (>= 8-sublane alignment)
STRIP_ROWS = 16                 # inner-loop strip: 16x512 f32 = 8 vregs per value


def _round_up(x, m):
    return ((x + m - 1) // m) * m


def _cdiv(a, b):
    return -(-a // b)


def _tiling(rows_needed):
    """(block_rows, grid_steps): bounded padding overshoot + even steps for v7x."""
    if rows_needed <= ROW_ALIGN:
        return ROW_ALIGN, 1                     # tiny problem: one aligned block
    # Pick the step count first (so overshoot is < grid_steps*ROW_ALIGN rows,
    # never a near-full extra block), keep it >= 2 and even so the v7x
    # megacore gets balanced halves; free on v5e/v6e (single TC).
    grid_steps = max(2, _cdiv(rows_needed, MAX_BLOCK_ROWS))
    if grid_steps % 2:
        grid_steps += 1
    block_rows = _round_up(_cdiv(rows_needed, grid_steps), ROW_ALIGN)
    return block_rows, grid_steps


def wcm_kernel(params_ref, sm_ref, lai_ref, ang_ref, out_ref):
    # --- read all 75 params once per grid step (SMEM scalar loads) ---------
    def branch_scalars(branch, negate_out=False):
        base = branch * PER_BRANCH
        w1 = [params_ref[base + k] for k in range(HIDDEN)]
        b1 = [params_ref[base + HIDDEN + k] for k in range(HIDDEN)]
        w2 = [params_ref[base + 2 * HIDDEN + k] for k in range(HIDDEN)]
        b2 = params_ref[base + 3 * HIDDEN]
        if negate_out:                          # fold the veg-branch negation
            w2 = [-w for w in w2]               # into the output weights
            b2 = -b2                            # (scalar ALU, free)
        return w1, b1, w2, b2

    soil_p = branch_scalars(0)
    veg_p = branch_scalars(1, negate_out=True)
    ang_p = branch_scalars(2)

    def mlp(p, x):
        """sum_k w2[k]*relu(w1[k]*x + b1[k]) + b2, pairwise-tree accumulation."""
        w1, b1, w2, b2 = p
        terms = [w2[k] * jnp.maximum(x * w1[k] + b1[k], 0.0) for k in range(HIDDEN)]
        while len(terms) > 1:                   # 8 -> 4 -> 2 -> 1 (short dep chain)
            terms = [terms[i] + terms[i + 1] for i in range(0, len(terms), 2)]
        return terms[0] + b2

    # --- strip loop: bound live ranges to ~1 strip per value ---------------
    n_strips = sm_ref.shape[0] // STRIP_ROWS    # static (block_rows % STRIP_ROWS == 0)

    def strip_body(i, carry):
        r0 = pl.multiple_of(i * STRIP_ROWS, STRIP_ROWS)
        rs = pl.ds(r0, STRIP_ROWS)
        # veg first, fold into soil immediately -> only one held strip value.
        veg = jnp.exp(jnp.minimum(mlp(veg_p, lai_ref[rs, :]), 0.0))
        sv = mlp(soil_p, sm_ref[rs, :]) * veg
        out_ref[rs, :] = sv + mlp(ang_p, ang_ref[rs, :])
        return carry

    lax.fori_loop(0, n_strips, strip_body, 0, unroll=False)


@jax.jit
def wcm_forward(params, sm, lai, ang):
    """params: (75,) f32 packed MLP weights.  sm/lai/ang: (N, 1) f32."""
    n = sm.shape[0]

    rows_needed = max(1, _cdiv(n, WIDTH))
    block_rows, grid_steps = _tiling(rows_needed)
    rows = grid_steps * block_rows
    n_pad = rows * WIDTH

    def to_slab(x):
        x = jnp.reshape(x.astype(jnp.float32), (-1,))
        if n_pad != n:                          # skip the HBM pad pass when possible
            x = jnp.pad(x, (0, n_pad - n))
        return jnp.reshape(x, (rows, WIDTH))

    sm_s, lai_s, ang_s = to_slab(sm), to_slab(lai), to_slab(ang)

    spec = pl.BlockSpec((block_rows, WIDTH), lambda i, p: (i, 0))
    out = pl.pallas_call(
        wcm_kernel,
        out_shape=jax.ShapeDtypeStruct((rows, WIDTH), jnp.float32),
        grid_spec=pltpu.PrefetchScalarGridSpec(
            num_scalar_prefetch=1,              # params land in SMEM
            grid=(grid_steps,),
            in_specs=[spec, spec, spec],
            out_specs=spec,
        ),
        compiler_params=pltpu.CompilerParams(
            dimension_semantics=("parallel",)),
        cost_estimate=pl.CostEstimate(
            flops=125 * n_pad, transcendentals=n_pad, bytes_accessed=16 * n_pad),
    )(params, sm_s, lai_s, ang_s)

    out = jnp.reshape(out, (-1,))
    if n_pad != n:
        out = out[:n]
    return out.reshape(n, 1)


def init_params(key):
    """Deterministic init of the 3 tiny MLPs, packed into a flat (75,) array.

    Per-branch layout: [w1(8) | b1(8) | w2(8) | b2(1)];
    branches: 0 = soil_transform, 1 = veg_transform, 2 = angle_transform.
    """
    rows = []
    for b in range(3):
        kb = jax.random.fold_in(key, b)
        k1, k2, k3, k4 = jax.random.split(kb, 4)
        w1 = jax.random.normal(k1, (HIDDEN,), jnp.float32) * 0.5   # Linear(1,8).weight[:,0]
        b1 = jax.random.normal(k2, (HIDDEN,), jnp.float32) * 0.1   # Linear(1,8).bias
        w2 = jax.random.normal(k3, (HIDDEN,), jnp.float32) * 0.5   # Linear(8,1).weight[0,:]
        b2 = jax.random.normal(k4, (1,), jnp.float32) * 0.1        # Linear(8,1).bias
        rows.append(jnp.concatenate([w1, b1, w2, b2]))
    return jnp.concatenate(rows)  # (75,)


def wcm_reference(params, sm, lai, ang):
    """Pure-JAX reference mirroring the PyTorch forward."""
    def mlp(branch, x):
        base = branch * PER_BRANCH
        w1 = params[base:base + HIDDEN]
        b1 = params[base + HIDDEN:base + 2 * HIDDEN]
        w2 = params[base + 2 * HIDDEN:base + 3 * HIDDEN]
        b2 = params[base + 3 * HIDDEN]
        h = jnp.maximum(x * w1[None, :] + b1[None, :], 0.0)   # (N, 8)
        return h @ w2[:, None] + b2                            # (N, 1)

    soil_sig = mlp(0, sm)
    veg_attn = jnp.exp(-jnp.maximum(mlp(1, lai), 0.0))
    angle_mod = mlp(2, ang)
    return soil_sig * veg_attn + angle_mod


if __name__ == "__main__":
    key = jax.random.PRNGKey(0)
    k_sm, k_lai, k_ang, k_par = jax.random.split(key, 4)
    params = init_params(k_par)

    def run_case(n, k0):
        ka, kb, kc = jax.random.split(k0, 3)
        SM = jax.random.uniform(ka, (n, 1), jnp.float32)                 # soil moisture
        LAI = jax.random.uniform(kb, (n, 1), jnp.float32) * 5.0         # leaf area index
        IncAngle = jax.random.uniform(kc, (n, 1), jnp.float32) * 60.0   # incidence angle
        sigma0 = jax.block_until_ready(wcm_forward(params, SM, LAI, IncAngle))
        ref = wcm_reference(params, SM, LAI, IncAngle)
        assert sigma0.shape == (n, 1)
        assert jnp.allclose(sigma0, ref, atol=1e-5, rtol=1e-5)

    run_case(4096, k_sm)   # tile-aligned path (no pad pass)
    run_case(777, k_lai)   # ragged path (single minimal pad + slice back)

    print("KERNEL_OK")
</pallas_src>

<mosaic_0001>
module attributes {stable_mosaic.version = 11 : i64} {
  func.func @wcm_kernel(%arg0: i32, %arg1: memref<75xf32, #tpu.memory_space<smem>>, %arg2: memref<16x512xf32, #tpu.memory_space<vmem>>, %arg3: memref<16x512xf32, #tpu.memory_space<vmem>>, %arg4: memref<16x512xf32, #tpu.memory_space<vmem>>, %arg5: memref<16x512xf32, #tpu.memory_space<vmem>>) attributes {dimension_semantics = [#tpu.dimension_semantics<parallel>], iteration_bounds = array<i64: 1>, scalar_prefetch = 1 : i64, scratch_operands = 0 : i64, tpu.core_type = #tpu.core_type<tc>, window_params = [{transform_indices = @transform_0, window_bounds = array<i64: 16, 512>}, {transform_indices = @transform_1, window_bounds = array<i64: 16, 512>}, {transform_indices = @transform_2, window_bounds = array<i64: 16, 512>}, {transform_indices = @transform_3, window_bounds = array<i64: 16, 512>}]} {
    %c0 = arith.constant 0 : index
    %0 = memref.load %arg1[%c0] : memref<75xf32, #tpu.memory_space<smem>>
    %c1 = arith.constant 1 : index
    %1 = memref.load %arg1[%c1] : memref<75xf32, #tpu.memory_space<smem>>
    %c2 = arith.constant 2 : index
    %2 = memref.load %arg1[%c2] : memref<75xf32, #tpu.memory_space<smem>>
    %c3 = arith.constant 3 : index
    %3 = memref.load %arg1[%c3] : memref<75xf32, #tpu.memory_space<smem>>
    %c4 = arith.constant 4 : index
    %4 = memref.load %arg1[%c4] : memref<75xf32, #tpu.memory_space<smem>>
    %c5 = arith.constant 5 : index
    %5 = memref.load %arg1[%c5] : memref<75xf32, #tpu.memory_space<smem>>
    %c6 = arith.constant 6 : index
    %6 = memref.load %arg1[%c6] : memref<75xf32, #tpu.memory_space<smem>>
    %c7 = arith.constant 7 : index
    %7 = memref.load %arg1[%c7] : memref<75xf32, #tpu.memory_space<smem>>
    %c8 = arith.constant 8 : index
    %8 = memref.load %arg1[%c8] : memref<75xf32, #tpu.memory_space<smem>>
    %c9 = arith.constant 9 : index
    %9 = memref.load %arg1[%c9] : memref<75xf32, #tpu.memory_space<smem>>
    %c10 = arith.constant 10 : index
    %10 = memref.load %arg1[%c10] : memref<75xf32, #tpu.memory_space<smem>>
    %c11 = arith.constant 11 : index
    %11 = memref.load %arg1[%c11] : memref<75xf32, #tpu.memory_space<smem>>
    %c12 = arith.constant 12 : index
    %12 = memref.load %arg1[%c12] : memref<75xf32, #tpu.memory_space<smem>>
    %c13 = arith.constant 13 : index
    %13 = memref.load %arg1[%c13] : memref<75xf32, #tpu.memory_space<smem>>
    %c14 = arith.constant 14 : index
    %14 = memref.load %arg1[%c14] : memref<75xf32, #tpu.memory_space<smem>>
    %c15 = arith.constant 15 : index
    %15 = memref.load %arg1[%c15] : memref<75xf32, #tpu.memory_space<smem>>
    %c16 = arith.constant 16 : index
    %16 = memref.load %arg1[%c16] : memref<75xf32, #tpu.memory_space<smem>>
    %c17 = arith.constant 17 : index
    %17 = memref.load %arg1[%c17] : memref<75xf32, #tpu.memory_space<smem>>
    %c18 = arith.constant 18 : index
    %18 = memref.load %arg1[%c18] : memref<75xf32, #tpu.memory_space<smem>>
    %c19 = arith.constant 19 : index
    %19 = memref.load %arg1[%c19] : memref<75xf32, #tpu.memory_space<smem>>
    %c20 = arith.constant 20 : index
    %20 = memref.load %arg1[%c20] : memref<75xf32, #tpu.memory_space<smem>>
    %c21 = arith.constant 21 : index
    %21 = memref.load %arg1[%c21] : memref<75xf32, #tpu.memory_space<smem>>
    %c22 = arith.constant 22 : index
    %22 = memref.load %arg1[%c22] : memref<75xf32, #tpu.memory_space<smem>>
    %c23 = arith.constant 23 : index
    %23 = memref.load %arg1[%c23] : memref<75xf32, #tpu.memory_space<smem>>
    %c24 = arith.constant 24 : index
    %24 = memref.load %arg1[%c24] : memref<75xf32, #tpu.memory_space<smem>>
    %c25 = arith.constant 25 : index
    %25 = memref.load %arg1[%c25] : memref<75xf32, #tpu.memory_space<smem>>
    %c26 = arith.constant 26 : index
    %26 = memref.load %arg1[%c26] : memref<75xf32, #tpu.memory_space<smem>>
    %c27 = arith.constant 27 : index
    %27 = memref.load %arg1[%c27] : memref<75xf32, #tpu.memory_space<smem>>
    %c28 = arith.constant 28 : index
    %28 = memref.load %arg1[%c28] : memref<75xf32, #tpu.memory_space<smem>>
    %c29 = arith.constant 29 : index
    %29 = memref.load %arg1[%c29] : memref<75xf32, #tpu.memory_space<smem>>
    %c30 = arith.constant 30 : index
    %30 = memref.load %arg1[%c30] : memref<75xf32, #tpu.memory_space<smem>>
    %c31 = arith.constant 31 : index
    %31 = memref.load %arg1[%c31] : memref<75xf32, #tpu.memory_space<smem>>
    %c32 = arith.constant 32 : index
    %32 = memref.load %arg1[%c32] : memref<75xf32, #tpu.memory_space<smem>>
    %c33 = arith.constant 33 : index
    %33 = memref.load %arg1[%c33] : memref<75xf32, #tpu.memory_space<smem>>
    %c34 = arith.constant 34 : index
    %34 = memref.load %arg1[%c34] : memref<75xf32, #tpu.memory_space<smem>>
    %c35 = arith.constant 35 : index
    %35 = memref.load %arg1[%c35] : memref<75xf32, #tpu.memory_space<smem>>
    %c36 = arith.constant 36 : index
    %36 = memref.load %arg1[%c36] : memref<75xf32, #tpu.memory_space<smem>>
    %c37 = arith.constant 37 : index
    %37 = memref.load %arg1[%c37] : memref<75xf32, #tpu.memory_space<smem>>
    %c38 = arith.constant 38 : index
    %38 = memref.load %arg1[%c38] : memref<75xf32, #tpu.memory_space<smem>>
    %c39 = arith.constant 39 : index
    %39 = memref.load %arg1[%c39] : memref<75xf32, #tpu.memory_space<smem>>
    %c40 = arith.constant 40 : index
    %40 = memref.load %arg1[%c40] : memref<75xf32, #tpu.memory_space<smem>>
    %c41 = arith.constant 41 : index
    %41 = memref.load %arg1[%c41] : memref<75xf32, #tpu.memory_space<smem>>
    %c42 = arith.constant 42 : index
    %42 = memref.load %arg1[%c42] : memref<75xf32, #tpu.memory_space<smem>>
    %c43 = arith.constant 43 : index
    %43 = memref.load %arg1[%c43] : memref<75xf32, #tpu.memory_space<smem>>
    %c44 = arith.constant 44 : index
    %44 = memref.load %arg1[%c44] : memref<75xf32, #tpu.memory_space<smem>>
    %c45 = arith.constant 45 : index
    %45 = memref.load %arg1[%c45] : memref<75xf32, #tpu.memory_space<smem>>
    %c46 = arith.constant 46 : index
    %46 = memref.load %arg1[%c46] : memref<75xf32, #tpu.memory_space<smem>>
    %c47 = arith.constant 47 : index
    %47 = memref.load %arg1[%c47] : memref<75xf32, #tpu.memory_space<smem>>
    %c48 = arith.constant 48 : index
    %48 = memref.load %arg1[%c48] : memref<75xf32, #tpu.memory_space<smem>>
    %c49 = arith.constant 49 : index
    %49 = memref.load %arg1[%c49] : memref<75xf32, #tpu.memory_space<smem>>
    %cst = arith.constant 0.000000e+00 : f32
    %50 = arith.subf %cst, %41 : f32
    %cst_0 = arith.constant 0.000000e+00 : f32
    %51 = arith.subf %cst_0, %42 : f32
    %cst_1 = arith.constant 0.000000e+00 : f32
    %52 = arith.subf %cst_1, %43 : f32
    %cst_2 = arith.constant 0.000000e+00 : f32
    %53 = arith.subf %cst_2, %44 : f32
    %cst_3 = arith.constant 0.000000e+00 : f32
    %54 = arith.subf %cst_3, %45 : f32
    %cst_4 = arith.constant 0.000000e+00 : f32
    %55 = arith.subf %cst_4, %46 : f32
    %cst_5 = arith.constant 0.000000e+00 : f32
    %56 = arith.subf %cst_5, %47 : f32
    %cst_6 = arith.constant 0.000000e+00 : f32
    %57 = arith.subf %cst_6, %48 : f32
    %cst_7 = arith.constant 0.000000e+00 : f32
    %58 = arith.subf %cst_7, %49 : f32
    %c50 = arith.constant 50 : index
    %59 = memref.load %arg1[%c50] : memref<75xf32, #tpu.memory_space<smem>>
    %c51 = arith.constant 51 : index
    %60 = memref.load %arg1[%c51] : memref<75xf32, #tpu.memory_space<smem>>
    %c52 = arith.constant 52 : index
    %61 = memref.load %arg1[%c52] : memref<75xf32, #tpu.memory_space<smem>>
    %c53 = arith.constant 53 : index
    %62 = memref.load %arg1[%c53] : memref<75xf32, #tpu.memory_space<smem>>
    %c54 = arith.constant 54 : index
    %63 = memref.load %arg1[%c54] : memref<75xf32, #tpu.memory_space<smem>>
    %c55 = arith.constant 55 : index
    %64 = memref.load %arg1[%c55] : memref<75xf32, #tpu.memory_space<smem>>
    %c56 = arith.constant 56 : index
    %65 = memref.load %arg1[%c56] : memref<75xf32, #tpu.memory_space<smem>>
    %c57 = arith.constant 57 : index
    %66 = memref.load %arg1[%c57] : memref<75xf32, #tpu.memory_space<smem>>
    %c58 = arith.constant 58 : index
    %67 = memref.load %arg1[%c58] : memref<75xf32, #tpu.memory_space<smem>>
    %c59 = arith.constant 59 : index
    %68 = memref.load %arg1[%c59] : memref<75xf32, #tpu.memory_space<smem>>
    %c60 = arith.constant 60 : index
    %69 = memref.load %arg1[%c60] : memref<75xf32, #tpu.memory_space<smem>>
    %c61 = arith.constant 61 : index
    %70 = memref.load %arg1[%c61] : memref<75xf32, #tpu.memory_space<smem>>
    %c62 = arith.constant 62 : index
    %71 = memref.load %arg1[%c62] : memref<75xf32, #tpu.memory_space<smem>>
    %c63 = arith.constant 63 : index
    %72 = memref.load %arg1[%c63] : memref<75xf32, #tpu.memory_space<smem>>
    %c64 = arith.constant 64 : index
    %73 = memref.load %arg1[%c64] : memref<75xf32, #tpu.memory_space<smem>>
    %c65 = arith.constant 65 : index
    %74 = memref.load %arg1[%c65] : memref<75xf32, #tpu.memory_space<smem>>
    %c66 = arith.constant 66 : index
    %75 = memref.load %arg1[%c66] : memref<75xf32, #tpu.memory_space<smem>>
    %c67 = arith.constant 67 : index
    %76 = memref.load %arg1[%c67] : memref<75xf32, #tpu.memory_space<smem>>
    %c68 = arith.constant 68 : index
    %77 = memref.load %arg1[%c68] : memref<75xf32, #tpu.memory_space<smem>>
    %c69 = arith.constant 69 : index
    %78 = memref.load %arg1[%c69] : memref<75xf32, #tpu.memory_space<smem>>
    %c70 = arith.constant 70 : index
    %79 = memref.load %arg1[%c70] : memref<75xf32, #tpu.memory_space<smem>>
    %c71 = arith.constant 71 : index
    %80 = memref.load %arg1[%c71] : memref<75xf32, #tpu.memory_space<smem>>
    %c72 = arith.constant 72 : index
    %81 = memref.load %arg1[%c72] : memref<75xf32, #tpu.memory_space<smem>>
    %c73 = arith.constant 73 : index
    %82 = memref.load %arg1[%c73] : memref<75xf32, #tpu.memory_space<smem>>
    %c74 = arith.constant 74 : index
    %83 = memref.load %arg1[%c74] : memref<75xf32, #tpu.memory_space<smem>>
    %c0_i32 = arith.constant 0 : i32
    %c16_i32 = arith.constant 16 : i32
    %84 = arith.muli %c0_i32, %c16_i32 : i32
    %85 = tpu.assume_multiple %84, 16 : i32
    %86 = arith.index_cast %85 : i32 to index
    %c0_8 = arith.constant 0 : index
    %87 = vector.load %arg3[%86, %c0_8] : memref<16x512xf32, #tpu.memory_space<vmem>>, vector<16x512xf32>
    %88 = vector.broadcast %25 : f32 to vector<16x512xf32>
    %89 = arith.mulf %87, %88 : vector<16x512xf32>
    %90 = vector.broadcast %33 : f32 to vector<16x512xf32>
    %91 = arith.addf %89, %90 : vector<16x512xf32>
    %cst_9 = arith.constant 0.000000e+00 : f32
    %92 = vector.broadcast %cst_9 : f32 to vector<16x512xf32>
    %93 = arith.maximumf %91, %92 : vector<16x512xf32>
    %94 = vector.broadcast %50 : f32 to vector<16x512xf32>
    %95 = arith.mulf %94, %93 : vector<16x512xf32>
    %96 = vector.broadcast %26 : f32 to vector<16x512xf32>
    %97 = arith.mulf %87, %96 : vector<16x512xf32>
    %98 = vector.broadcast %34 : f32 to vector<16x512xf32>
    %99 = arith.addf %97, %98 : vector<16x512xf32>
    %cst_10 = arith.constant 0.000000e+00 : f32
    %100 = vector.broadcast %cst_10 : f32 to vector<16x512xf32>
    %101 = arith.maximumf %99, %100 : vector<16x512xf32>
    %102 = vector.broadcast %51 : f32 to vector<16x512xf32>
    %103 = arith.mulf %102, %101 : vector<16x512xf32>
    %104 = vector.broadcast %27 : f32 to vector<16x512xf32>
    %105 = arith.mulf %87, %104 : vector<16x512xf32>
    %106 = vector.broadcast %35 : f32 to vector<16x512xf32>
    %107 = arith.addf %105, %106 : vector<16x512xf32>
    %cst_11 = arith.constant 0.000000e+00 : f32
    %108 = vector.broadcast %cst_11 : f32 to vector<16x512xf32>
    %109 = arith.maximumf %107, %108 : vector<16x512xf32>
    %110 = vector.broadcast %52 : f32 to vector<16x512xf32>
    %111 = arith.mulf %110, %109 : vector<16x512xf32>
    %112 = vector.broadcast %28 : f32 to vector<16x512xf32>
    %113 = arith.mulf %87, %112 : vector<16x512xf32>
    %114 = vector.broadcast %36 : f32 to vector<16x512xf32>
    %115 = arith.addf %113, %114 : vector<16x512xf32>
    %cst_12 = arith.constant 0.000000e+00 : f32
    %116 = vector.broadcast %cst_12 : f32 to vector<16x512xf32>
    %117 = arith.maximumf %115, %116 : vector<16x512xf32>
    %118 = vector.broadcast %53 : f32 to vector<16x512xf32>
    %119 = arith.mulf %118, %117 : vector<16x512xf32>
    %120 = vector.broadcast %29 : f32 to vector<16x512xf32>
    %121 = arith.mulf %87, %120 : vector<16x512xf32>
    %122 = vector.broadcast %37 : f32 to vector<16x512xf32>
    %123 = arith.addf %121, %122 : vector<16x512xf32>
    %cst_13 = arith.constant 0.000000e+00 : f32
    %124 = vector.broadcast %cst_13 : f32 to vector<16x512xf32>
    %125 = arith.maximumf %123, %124 : vector<16x512xf32>
    %126 = vector.broadcast %54 : f32 to vector<16x512xf32>
    %127 = arith.mulf %126, %125 : vector<16x512xf32>
    %128 = vector.broadcast %30 : f32 to vector<16x512xf32>
    %129 = arith.mulf %87, %128 : vector<16x512xf32>
    %130 = vector.broadcast %38 : f32 to vector<16x512xf32>
    %131 = arith.addf %129, %130 : vector<16x512xf32>
    %cst_14 = arith.constant 0.000000e+00 : f32
    %132 = vector.broadcast %cst_14 : f32 to vector<16x512xf32>
    %133 = arith.maximumf %131, %132 : vector<16x512xf32>
    %134 = vector.broadcast %55 : f32 to vector<16x512xf32>
    %135 = arith.mulf %134, %133 : vector<16x512xf32>
    %136 = vector.broadcast %31 : f32 to vector<16x512xf32>
    %137 = arith.mulf %87, %136 : vector<16x512xf32>
    %138 = vector.broadcast %39 : f32 to vector<16x512xf32>
    %139 = arith.addf %137, %138 : vector<16x512xf32>
    %cst_15 = arith.constant 0.000000e+00 : f32
    %140 = vector.broadcast %cst_15 : f32 to vector<16x512xf32>
    %141 = arith.maximumf %139, %140 : vector<16x512xf32>
    %142 = vector.broadcast %56 : f32 to vector<16x512xf32>
    %143 = arith.mulf %142, %141 : vector<16x512xf32>
    %144 = vector.broadcast %32 : f32 to vector<16x512xf32>
    %145 = arith.mulf %87, %144 : vector<16x512xf32>
    %146 = vector.broadcast %40 : f32 to vector<16x512xf32>
    %147 = arith.addf %145, %146 : vector<16x512xf32>
    %cst_16 = arith.constant 0.000000e+00 : f32
    %148 = vector.broadcast %cst_16 : f32 to vector<16x512xf32>
    %149 = arith.maximumf %147, %148 : vector<16x512xf32>
    %150 = vector.broadcast %57 : f32 to vector<16x512xf32>
    %151 = arith.mulf %150, %149 : vector<16x512xf32>
    %152 = arith.addf %95, %103 : vector<16x512xf32>
    %153 = arith.addf %111, %119 : vector<16x512xf32>
    %154 = arith.addf %127, %135 : vector<16x512xf32>
    %155 = arith.addf %143, %151 : vector<16x512xf32>
    %156 = arith.addf %152, %153 : vector<16x512xf32>
    %157 = arith.addf %154, %155 : vector<16x512xf32>
    %158 = arith.addf %156, %157 : vector<16x512xf32>
    %159 = vector.broadcast %58 : f32 to vector<16x512xf32>
    %160 = arith.addf %158, %159 : vector<16x512xf32>
    %cst_17 = arith.constant 0.000000e+00 : f32
    %161 = vector.broadcast %cst_17 : f32 to vector<16x512xf32>
    %162 = arith.minimumf %160, %161 : vector<16x512xf32>
    %163 = math.exp %162 : vector<16x512xf32>
    %164 = arith.index_cast %85 : i32 to index
    %c0_18 = arith.constant 0 : index
    %165 = vector.load %arg2[%164, %c0_18] : memref<16x512xf32, #tpu.memory_space<vmem>>, vector<16x512xf32>
    %166 = vector.broadcast %0 : f32 to vector<16x512xf32>
    %167 = arith.mulf %165, %166 : vector<16x512xf32>
    %168 = vector.broadcast %8 : f32 to vector<16x512xf32>
    %169 = arith.addf %167, %168 : vector<16x512xf32>
    %cst_19 = arith.constant 0.000000e+00 : f32
    %170 = vector.broadcast %cst_19 : f32 to vector<16x512xf32>
    %171 = arith.maximumf %169, %170 : vector<16x512xf32>
    %172 = vector.broadcast %16 : f32 to vector<16x512xf32>
    %173 = arith.mulf %172, %171 : vector<16x512xf32>
    %174 = vector.broadcast %1 : f32 to vector<16x512xf32>
    %175 = arith.mulf %165, %174 : vector<16x512xf32>
    %176 = vector.broadcast %9 : f32 to vector<16x512xf32>
    %177 = arith.addf %175, %176 : vector<16x512xf32>
    %cst_20 = arith.constant 0.000000e+00 : f32
    %178 = vector.broadcast %cst_20 : f32 to vector<16x512xf32>
    %179 = arith.maximumf %177, %178 : vector<16x512xf32>
    %180 = vector.broadcast %17 : f32 to vector<16x512xf32>
    %181 = arith.mulf %180, %179 : vector<16x512xf32>
    %182 = vector.broadcast %2 : f32 to vector<16x512xf32>
    %183 = arith.mulf %165, %182 : vector<16x512xf32>
    %184 = vector.broadcast %10 : f32 to vector<16x512xf32>
    %185 = arith.addf %183, %184 : vector<16x512xf32>
    %cst_21 = arith.constant 0.000000e+00 : f32
    %186 = vector.broadcast %cst_21 : f32 to vector<16x512xf32>
    %187 = arith.maximumf %185, %186 : vector<16x512xf32>
    %188 = vector.broadcast %18 : f32 to vector<16x512xf32>
    %189 = arith.mulf %188, %187 : vector<16x512xf32>
    %190 = vector.broadcast %3 : f32 to vector<16x512xf32>
    %191 = arith.mulf %165, %190 : vector<16x512xf32>
    %192 = vector.broadcast %11 : f32 to vector<16x512xf32>
    %193 = arith.addf %191, %192 : vector<16x512xf32>
    %cst_22 = arith.constant 0.000000e+00 : f32
    %194 = vector.broadcast %cst_22 : f32 to vector<16x512xf32>
    %195 = arith.maximumf %193, %194 : vector<16x512xf32>
    %196 = vector.broadcast %19 : f32 to vector<16x512xf32>
    %197 = arith.mulf %196, %195 : vector<16x512xf32>
    %198 = vector.broadcast %4 : f32 to vector<16x512xf32>
    %199 = arith.mulf %165, %198 : vector<16x512xf32>
    %200 = vector.broadcast %12 : f32 to vector<16x512xf32>
    %201 = arith.addf %199, %200 : vector<16x512xf32>
    %cst_23 = arith.constant 0.000000e+00 : f32
    %202 = vector.broadcast %cst_23 : f32 to vector<16x512xf32>
    %203 = arith.maximumf %201, %202 : vector<16x512xf32>
    %204 = vector.broadcast %20 : f32 to vector<16x512xf32>
    %205 = arith.mulf %204, %203 : vector<16x512xf32>
    %206 = vector.broadcast %5 : f32 to vector<16x512xf32>
    %207 = arith.mulf %165, %206 : vector<16x512xf32>
    %208 = vector.broadcast %13 : f32 to vector<16x512xf32>
    %209 = arith.addf %207, %208 : vector<16x512xf32>
    %cst_24 = arith.constant 0.000000e+00 : f32
    %210 = vector.broadcast %cst_24 : f32 to vector<16x512xf32>
    %211 = arith.maximumf %209, %210 : vector<16x512xf32>
    %212 = vector.broadcast %21 : f32 to vector<16x512xf32>
    %213 = arith.mulf %212, %211 : vector<16x512xf32>
    %214 = vector.broadcast %6 : f32 to vector<16x512xf32>
    %215 = arith.mulf %165, %214 : vector<16x512xf32>
    %216 = vector.broadcast %14 : f32 to vector<16x512xf32>
    %217 = arith.addf %215, %216 : vector<16x512xf32>
    %cst_25 = arith.constant 0.000000e+00 : f32
    %218 = vector.broadcast %cst_25 : f32 to vector<16x512xf32>
    %219 = arith.maximumf %217, %218 : vector<16x512xf32>
    %220 = vector.broadcast %22 : f32 to vector<16x512xf32>
    %221 = arith.mulf %220, %219 : vector<16x512xf32>
    %222 = vector.broadcast %7 : f32 to vector<16x512xf32>
    %223 = arith.mulf %165, %222 : vector<16x512xf32>
    %224 = vector.broadcast %15 : f32 to vector<16x512xf32>
    %225 = arith.addf %223, %224 : vector<16x512xf32>
    %cst_26 = arith.constant 0.000000e+00 : f32
    %226 = vector.broadcast %cst_26 : f32 to vector<16x512xf32>
    %227 = arith.maximumf %225, %226 : vector<16x512xf32>
    %228 = vector.broadcast %23 : f32 to vector<16x512xf32>
    %229 = arith.mulf %228, %227 : vector<16x512xf32>
    %230 = arith.addf %173, %181 : vector<16x512xf32>
    %231 = arith.addf %189, %197 : vector<16x512xf32>
    %232 = arith.addf %205, %213 : vector<16x512xf32>
    %233 = arith.addf %221, %229 : vector<16x512xf32>
    %234 = arith.addf %230, %231 : vector<16x512xf32>
    %235 = arith.addf %232, %233 : vector<16x512xf32>
    %236 = arith.addf %234, %235 : vector<16x512xf32>
    %237 = vector.broadcast %24 : f32 to vector<16x512xf32>
    %238 = arith.addf %236, %237 : vector<16x512xf32>
    %239 = arith.mulf %238, %163 : vector<16x512xf32>
    %240 = arith.index_cast %85 : i32 to index
    %c0_27 = arith.constant 0 : index
    %241 = vector.load %arg4[%240, %c0_27] : memref<16x512xf32, #tpu.memory_space<vmem>>, vector<16x512xf32>
    %242 = vector.broadcast %59 : f32 to vector<16x512xf32>
    %243 = arith.mulf %241, %242 : vector<16x512xf32>
    %244 = vector.broadcast %67 : f32 to vector<16x512xf32>
    %245 = arith.addf %243, %244 : vector<16x512xf32>
    %cst_28 = arith.constant 0.000000e+00 : f32
    %246 = vector.broadcast %cst_28 : f32 to vector<16x512xf32>
    %247 = arith.maximumf %245, %246 : vector<16x512xf32>
    %248 = vector.broadcast %75 : f32 to vector<16x512xf32>
    %249 = arith.mulf %248, %247 : vector<16x512xf32>
    %250 = vector.broadcast %60 : f32 to vector<16x512xf32>
    %251 = arith.mulf %241, %250 : vector<16x512xf32>
    %252 = vector.broadcast %68 : f32 to vector<16x512xf32>
    %253 = arith.addf %251, %252 : vector<16x512xf32>
    %cst_29 = arith.constant 0.000000e+00 : f32
    %254 = vector.broadcast %cst_29 : f32 to vector<16x512xf32>
    %255 = arith.maximumf %253, %254 : vector<16x512xf32>
    %256 = vector.broadcast %76 : f32 to vector<16x512xf32>
    %257 = arith.mulf %256, %255 : vector<16x512xf32>
    %258 = vector.broadcast %61 : f32 to vector<16x512xf32>
    %259 = arith.mulf %241, %258 : vector<16x512xf32>
    %260 = vector.broadcast %69 : f32 to vector<16x512xf32>
    %261 = arith.addf %259, %260 : vector<16x512xf32>
    %cst_30 = arith.constant 0.000000e+00 : f32
    %262 = vector.broadcast %cst_30 : f32 to vector<16x512xf32>
    %263 = arith.maximumf %261, %262 : vector<16x512xf32>
    %264 = vector.broadcast %77 : f32 to vector<16x512xf32>
    %265 = arith.mulf %264, %263 : vector<16x512xf32>
    %266 = vector.broadcast %62 : f32 to vector<16x512xf32>
    %267 = arith.mulf %241, %266 : vector<16x512xf32>
    %268 = vector.broadcast %70 : f32 to vector<16x512xf32>
    %269 = arith.addf %267, %268 : vector<16x512xf32>
    %cst_31 = arith.constant 0.000000e+00 : f32
    %270 = vector.broadcast %cst_31 : f32 to vector<16x512xf32>
    %271 = arith.maximumf %269, %270 : vector<16x512xf32>
    %272 = vector.broadcast %78 : f32 to vector<16x512xf32>
    %273 = arith.mulf %272, %271 : vector<16x512xf32>
    %274 = vector.broadcast %63 : f32 to vector<16x512xf32>
    %275 = arith.mulf %241, %274 : vector<16x512xf32>
    %276 = vector.broadcast %71 : f32 to vector<16x512xf32>
    %277 = arith.addf %275, %276 : vector<16x512xf32>
    %cst_32 = arith.constant 0.000000e+00 : f32
    %278 = vector.broadcast %cst_32 : f32 to vector<16x512xf32>
    %279 = arith.maximumf %277, %278 : vector<16x512xf32>
    %280 = vector.broadcast %79 : f32 to vector<16x512xf32>
    %281 = arith.mulf %280, %279 : vector<16x512xf32>
    %282 = vector.broadcast %64 : f32 to vector<16x512xf32>
    %283 = arith.mulf %241, %282 : vector<16x512xf32>
    %284 = vector.broadcast %72 : f32 to vector<16x512xf32>
    %285 = arith.addf %283, %284 : vector<16x512xf32>
    %cst_33 = arith.constant 0.000000e+00 : f32
    %286 = vector.broadcast %cst_33 : f32 to vector<16x512xf32>
    %287 = arith.maximumf %285, %286 : vector<16x512xf32>
    %288 = vector.broadcast %80 : f32 to vector<16x512xf32>
    %289 = arith.mulf %288, %287 : vector<16x512xf32>
    %290 = vector.broadcast %65 : f32 to vector<16x512xf32>
    %291 = arith.mulf %241, %290 : vector<16x512xf32>
    %292 = vector.broadcast %73 : f32 to vector<16x512xf32>
    %293 = arith.addf %291, %292 : vector<16x512xf32>
    %cst_34 = arith.constant 0.000000e+00 : f32
    %294 = vector.broadcast %cst_34 : f32 to vector<16x512xf32>
    %295 = arith.maximumf %293, %294 : vector<16x512xf32>
    %296 = vector.broadcast %81 : f32 to vector<16x512xf32>
    %297 = arith.mulf %296, %295 : vector<16x512xf32>
    %298 = vector.broadcast %66 : f32 to vector<16x512xf32>
    %299 = arith.mulf %241, %298 : vector<16x512xf32>
    %300 = vector.broadcast %74 : f32 to vector<16x512xf32>
    %301 = arith.addf %299, %300 : vector<16x512xf32>
    %cst_35 = arith.constant 0.000000e+00 : f32
    %302 = vector.broadcast %cst_35 : f32 to vector<16x512xf32>
    %303 = arith.maximumf %301, %302 : vector<16x512xf32>
    %304 = vector.broadcast %82 : f32 to vector<16x512xf32>
    %305 = arith.mulf %304, %303 : vector<16x512xf32>
    %306 = arith.addf %249, %257 : vector<16x512xf32>
    %307 = arith.addf %265, %273 : vector<16x512xf32>
    %308 = arith.addf %281, %289 : vector<16x512xf32>
    %309 = arith.addf %297, %305 : vector<16x512xf32>
    %310 = arith.addf %306, %307 : vector<16x512xf32>
    %311 = arith.addf %308, %309 : vector<16x512xf32>
    %312 = arith.addf %310, %311 : vector<16x512xf32>
    %313 = vector.broadcast %83 : f32 to vector<16x512xf32>
    %314 = arith.addf %312, %313 : vector<16x512xf32>
    %315 = arith.addf %239, %314 : vector<16x512xf32>
    %316 = arith.index_cast %85 : i32 to index
    %c0_36 = arith.constant 0 : index
    %317 = vector.load %arg5[%316, %c0_36] : memref<16x512xf32, #tpu.memory_space<vmem>>, vector<16x512xf32>
    tpu.vector_store %arg5[%316, %c0_36], %315 {strides = array<i32>} : memref<16x512xf32, #tpu.memory_space<vmem>>, vector<16x512xf32>,
    %c1_i32 = arith.constant 1 : i32
    return
  }
  func.func @transform_0(%arg0: i32, %arg1: memref<75xf32, #tpu.memory_space<smem>>) -> (i32, i32) {
    %c0_i32 = arith.constant 0 : i32
    %c0_i32_0 = arith.constant 0 : i32
    return %arg0, %c0_i32 : i32, i32
  }
  func.func @transform_1(%arg0: i32, %arg1: memref<75xf32, #tpu.memory_space<smem>>) -> (i32, i32) {
    %c0_i32 = arith.constant 0 : i32
    %c0_i32_0 = arith.constant 0 : i32
    return %arg0, %c0_i32 : i32, i32
  }
  func.func @transform_2(%arg0: i32, %arg1: memref<75xf32, #tpu.memory_space<smem>>) -> (i32, i32) {
    %c0_i32 = arith.constant 0 : i32
    %c0_i32_0 = arith.constant 0 : i32
    return %arg0, %c0_i32 : i32, i32
  }
  func.func @transform_3(%arg0: i32, %arg1: memref<75xf32, #tpu.memory_space<smem>>) -> (i32, i32) {
    %c0_i32 = arith.constant 0 : i32
    %c0_i32_0 = arith.constant 0 : i32
    return %arg0, %c0_i32 : i32, i32
  }
}

</mosaic_0001>

<llo_original>
// kernel: wcm_forward.1
$region0: #{wcm_forward.1}
  #allocation0 [shape = 'u32[]', space=smem, size = 0x4, offset = 0x4, fixed_abs, tag = 'smem constant byte address 0x4 - core index']
  #allocation1 [shape = 'u32[72,128]{1,0:T(1,128)}', space=vmem, size = 0x9000, scoped, tag = 'internal scratch']
  #allocation2 [shape = 's32[1]{0}', space=sflag, size = 0x4, scoped, tag = 'scoped memory for wcm_forward.1']
  #allocation3 [shape = 'u8[512]{0}', space=smem, size = 0x200, scoped, tag = 'prefetched SMEM operand 0']
  %s0 = inlined_call_operand.vmem [shape: f32[75], index: 0, kind: input, shape index: {}]
  %s1 = inlined_call_operand.vmem [shape: f32[16,512], index: 1, kind: input, shape index: {}]
  %s2 = inlined_call_operand.vmem [shape: f32[16,512], index: 2, kind: input, shape index: {}]
  %s3 = inlined_call_operand.vmem [shape: f32[16,512], index: 3, kind: input, shape index: {}]
  %s4 = inlined_call_operand.vmem [shape: f32[16,512], index: 4, kind: output, shape index: {}]
  %s5 = sld [smem:[#allocation0]]
  $region22: #{wcm_forward.1} parent=0
    _
  %s7 = ssub.s32 1, %s5
  %s8 = scalar_select 0, %s7, %s5
  %s10 = sshll.u32 %s0, 4
  %s11 = int_to_ptr.vmem [resolvable:$true] %s10
  %13 = dma.vmem_to_smem %s11, 16, [#allocation3], [#allocation2]
  %15 = dma.done [#allocation2], 16
  %16 = sfence
  // Predicated region
  $region2: #{wcm_forward.1} parent=0 // pred_check
    _
  $region3: #{wcm_forward.1} parent=0 // pred_check_branch
    %18 = sbr.rel (0) target = $region5
  $region4: #{wcm_forward.1} parent=0 // pred_region
    _
  $region5: #{wcm_forward.1} parent=0 // pred_fallthru
    _
  // Predicated region
  $region6: #{wcm_forward.1} parent=0 // pred_check
    _
  $region7: #{wcm_forward.1} parent=0 // pred_check_branch
    %20 = sbr.rel (0) target = $region9
  $region8: #{wcm_forward.1} parent=0 // pred_region
    _
  $region9: #{wcm_forward.1} parent=0 // pred_fallthru
    _
  // Predicated region
  $region10: #{wcm_forward.1} parent=0 // pred_check
    _
  $region11: #{wcm_forward.1} parent=0 // pred_check_branch
    %22 = sbr.rel (0) target = $region13
  $region12: #{wcm_forward.1} parent=0 // pred_region
    _
  $region13: #{wcm_forward.1} parent=0 // pred_fallthru
    _
  %s23 = sld [smem:[#allocation3]]
  %s24 = sld [smem:[#allocation3 + $0x1]]
  %s25 = sld [smem:[#allocation3 + $0x2]]
  %s26 = sld [smem:[#allocation3 + $0x3]]
  %s27 = sld [smem:[#allocation3 + $0x4]]
  %s28 = sld [smem:[#allocation3 + $0x5]]
  %s29 = sld [smem:[#allocation3 + $0x6]]
  %s30 = sld [smem:[#allocation3 + $0x7]]
  %s31 = sld [smem:[#allocation3 + $0x8]]
  %s32 = sld [smem:[#allocation3 + $0x9]]
  %s33 = sld [smem:[#allocation3 + $0xa]]
  %s34 = sld [smem:[#allocation3 + $0xb]]
  %s35 = sld [smem:[#allocation3 + $0xc]]
  %s36 = sld [smem:[#allocation3 + $0xd]]
  %s37 = sld [smem:[#allocation3 + $0xe]]
  %s38 = sld [smem:[#allocation3 + $0xf]]
  %s39 = sld [smem:[#allocation3 + $0x10]]
  %s40 = sld [smem:[#allocation3 + $0x11]]
  %s41 = sld [smem:[#allocation3 + $0x12]]
  %s42 = sld [smem:[#allocation3 + $0x13]]
  %s43 = sld [smem:[#allocation3 + $0x14]]
  %s44 = sld [smem:[#allocation3 + $0x15]]
  %s45 = sld [smem:[#allocation3 + $0x16]]
  %s46 = sld [smem:[#allocation3 + $0x17]]
  %s47 = sld [smem:[#allocation3 + $0x18]]
  %s48 = sld [smem:[#allocation3 + $0x19]]
  %s49 = sld [smem:[#allocation3 + $0x1a]]
  %s50 = sld [smem:[#allocation3 + $0x1b]]
  %s51 = sld [smem:[#allocation3 + $0x1c]]
  %s52 = sld [smem:[#allocation3 + $0x1d]]
  %s53 = sld [smem:[#allocation3 + $0x1e]]
  %s54 = sld [smem:[#allocation3 + $0x1f]]
  %s55 = sld [smem:[#allocation3 + $0x20]]
  %s56 = sld [smem:[#allocation3 + $0x21]]
  %s57 = sld [smem:[#allocation3 + $0x22]]
  %s58 = sld [smem:[#allocation3 + $0x23]]
  %s59 = sld [smem:[#allocation3 + $0x24]]
  %s60 = sld [smem:[#allocation3 + $0x25]]
  %s61 = sld [smem:[#allocation3 + $0x26]]
  %s62 = sld [smem:[#allocation3 + $0x27]]
  %s63 = sld [smem:[#allocation3 + $0x28]]
  %s64 = sld [smem:[#allocation3 + $0x29]]
  %s65 = sld [smem:[#allocation3 + $0x2a]]
  %s66 = sld [smem:[#allocation3 + $0x2b]]
  %s67 = sld [smem:[#allocation3 + $0x2c]]
  %s68 = sld [smem:[#allocation3 + $0x2d]]
  %s69 = sld [smem:[#allocation3 + $0x2e]]
  %s70 = sld [smem:[#allocation3 + $0x2f]]
  %s71 = sld [smem:[#allocation3 + $0x30]]
  %s72 = sld [smem:[#allocation3 + $0x31]]
  %s73 = ssub.f32 0.0, %s64
  %s74 = ssub.f32 0.0, %s65
  %s75 = ssub.f32 0.0, %s66
  %s76 = ssub.f32 0.0, %s67
  %s77 = ssub.f32 0.0, %s68
  %s78 = ssub.f32 0.0, %s69
  %s79 = ssub.f32 0.0, %s70
  %s80 = ssub.f32 0.0, %s71
  %s81 = ssub.f32 0.0, %s72
  %s82 = sld [smem:[#allocation3 + $0x32]]
  %s83 = sld [smem:[#allocation3 + $0x33]]
  %s84 = sld [smem:[#allocation3 + $0x34]]
  %s85 = sld [smem:[#allocation3 + $0x35]]
  %s86 = sld [smem:[#allocation3 + $0x36]]
  %s87 = sld [smem:[#allocation3 + $0x37]]
  %s88 = sld [smem:[#allocation3 + $0x38]]
  %s89 = sld [smem:[#allocation3 + $0x39]]
  %s90 = sld [smem:[#allocation3 + $0x3a]]
  %s91 = sld [smem:[#allocation3 + $0x3b]]
  %s92 = sld [smem:[#allocation3 + $0x3c]]
  %s93 = sld [smem:[#allocation3 + $0x3d]]
  %s94 = sld [smem:[#allocation3 + $0x3e]]
  %s95 = sld [smem:[#allocation3 + $0x3f]]
  %s96 = sld [smem:[#allocation3 + $0x40]]
  %s97 = sld [smem:[#allocation3 + $0x41]]
  %s98 = sld [smem:[#allocation3 + $0x42]]
  %s99 = sld [smem:[#allocation3 + $0x43]]
  %s100 = sld [smem:[#allocation3 + $0x44]]
  %s101 = sld [smem:[#allocation3 + $0x45]]
  %s102 = sld [smem:[#allocation3 + $0x46]]
  %s103 = sld [smem:[#allocation3 + $0x47]]
  %s104 = sld [smem:[#allocation3 + $0x48]]
  %s105 = sld [smem:[#allocation3 + $0x49]]
  %s106 = sld [smem:[#allocation3 + $0x4a]]
  %s107 = smul.u32 0, 4
  %s108 = smul.addr %s107, 8
  %s109 = scalar_lea.vmem %s2, %s108
  %v110 = vld [vmem:[%s109] sm:$0xff]
  %v111 = vld [vmem:[%s109 + $0x8] sm:$0xff]
  %v112 = vld [vmem:[%s109 + $0x10] sm:$0xff]
  %v113 = vld [vmem:[%s109 + $0x18] sm:$0xff]
  %v114 = vld [vmem:[%s109 + $0x20] sm:$0xff]
  %v115 = vld [vmem:[%s109 + $0x28] sm:$0xff]
  %v116 = vld [vmem:[%s109 + $0x30] sm:$0xff]
  %v117 = vld [vmem:[%s109 + $0x38] sm:$0xff]
  %v118 = vstv %s48
  %v119 = vmul.f32 %v110, %v118
  %v120 = vmul.f32 %v111, %v118
  %v121 = vmul.f32 %v112, %v118
  %v122 = vmul.f32 %v113, %v118
  %v123 = vmul.f32 %v114, %v118
  %v124 = vmul.f32 %v115, %v118
  %v125 = vmul.f32 %v116, %v118
  %v126 = vmul.f32 %v117, %v118
  %v127 = vstv %s56
  %v128 = vadd.f32 %v119, %v127
  %v129 = vadd.f32 %v120, %v127
  %v130 = vadd.f32 %v121, %v127
  %v131 = vadd.f32 %v122, %v127
  %v132 = vadd.f32 %v123, %v127
  %v133 = vadd.f32 %v124, %v127
  %v134 = vadd.f32 %v125, %v127
  %v135 = vadd.f32 %v126, %v127
  %v136 = vmax.f32 %v128, 0.0
  %v137 = vmax.f32 %v129, 0.0
  %v138 = vmax.f32 %v130, 0.0
  %v139 = vmax.f32 %v131, 0.0
  %v140 = vmax.f32 %v132, 0.0
  %v141 = vmax.f32 %v133, 0.0
  %v142 = vmax.f32 %v134, 0.0
  %v143 = vmax.f32 %v135, 0.0
  %v144 = vstv %s73
  %v145 = vmul.f32 %v144, %v136
  %v146 = vmul.f32 %v144, %v137
  %v147 = vmul.f32 %v144, %v138
  %v148 = vmul.f32 %v144, %v139
  %v149 = vmul.f32 %v144, %v140
  %v150 = vmul.f32 %v144, %v141
  %v151 = vmul.f32 %v144, %v142
  %v152 = vmul.f32 %v144, %v143
  %v153 = vstv %s49
  %v154 = vmul.f32 %v110, %v153
  %v155 = vmul.f32 %v111, %v153
  %v156 = vmul.f32 %v112, %v153
  %v157 = vmul.f32 %v113, %v153
  %v158 = vmul.f32 %v114, %v153
  %v159 = vmul.f32 %v115, %v153
  %v160 = vmul.f32 %v116, %v153
  %v161 = vmul.f32 %v117, %v153
  %v162 = vstv %s57
  %v163 = vadd.f32 %v154, %v162
  %v164 = vadd.f32 %v155, %v162
  %v165 = vadd.f32 %v156, %v162
  %v166 = vadd.f32 %v157, %v162
  %v167 = vadd.f32 %v158, %v162
  %v168 = vadd.f32 %v159, %v162
  %v169 = vadd.f32 %v160, %v162
  %v170 = vadd.f32 %v161, %v162
  %v171 = vmax.f32 %v163, 0.0
  %v172 = vmax.f32 %v164, 0.0
  %v173 = vmax.f32 %v165, 0.0
  %v174 = vmax.f32 %v166, 0.0
  %v175 = vmax.f32 %v167, 0.0
  %v176 = vmax.f32 %v168, 0.0
  %v177 = vmax.f32 %v169, 0.0
  %v178 = vmax.f32 %v170, 0.0
  %v179 = vstv %s74
  %v180 = vmul.f32 %v179, %v171
  %v181 = vmul.f32 %v179, %v172
  %v182 = vmul.f32 %v179, %v173
  %v183 = vmul.f32 %v179, %v174
  %v184 = vmul.f32 %v179, %v175
  %v185 = vmul.f32 %v179, %v176
  %v186 = vmul.f32 %v179, %v177
  %v187 = vmul.f32 %v179, %v178
  %v188 = vstv %s50
  %v189 = vmul.f32 %v110, %v188
  %v190 = vmul.f32 %v111, %v188
  %v191 = vmul.f32 %v112, %v188
  %v192 = vmul.f32 %v113, %v188
  %v193 = vmul.f32 %v114, %v188
  %v194 = vmul.f32 %v115, %v188
  %v195 = vmul.f32 %v116, %v188
  %v196 = vmul.f32 %v117, %v188
  %v197 = vstv %s58
  %v198 = vadd.f32 %v189, %v197
  %v199 = vadd.f32 %v190, %v197
  %v200 = vadd.f32 %v191, %v197
  %v201 = vadd.f32 %v192, %v197
  %v202 = vadd.f32 %v193, %v197
  %v203 = vadd.f32 %v194, %v197
  %v204 = vadd.f32 %v195, %v197
  %v205 = vadd.f32 %v196, %v197
  %v206 = vmax.f32 %v198, 0.0
  %v207 = vmax.f32 %v199, 0.0
  %v208 = vmax.f32 %v200, 0.0
  %v209 = vmax.f32 %v201, 0.0
  %v210 = vmax.f32 %v202, 0.0
  %v211 = vmax.f32 %v203, 0.0
  %v212 = vmax.f32 %v204, 0.0
  %v213 = vmax.f32 %v205, 0.0
  %v214 = vstv %s75
  %v215 = vmul.f32 %v214, %v206
  %v216 = vmul.f32 %v214, %v207
  %v217 = vmul.f32 %v214, %v208
  %v218 = vmul.f32 %v214, %v209
  %v219 = vmul.f32 %v214, %v210
  %v220 = vmul.f32 %v214, %v211
  %v221 = vmul.f32 %v214, %v212
  %v222 = vmul.f32 %v214, %v213
  %v223 = vstv %s51
  %v224 = vmul.f32 %v110, %v223
  %v225 = vmul.f32 %v111, %v223
  %v226 = vmul.f32 %v112, %v223
  %v227 = vmul.f32 %v113, %v223
  %v228 = vmul.f32 %v114, %v223
  %v229 = vmul.f32 %v115, %v223
  %v230 = vmul.f32 %v116, %v223
  %v231 = vmul.f32 %v117, %v223
  %v232 = vstv %s59
  %v233 = vadd.f32 %v224, %v232
  %v234 = vadd.f32 %v225, %v232
  %v235 = vadd.f32 %v226, %v232
  %v236 = vadd.f32 %v227, %v232
  %v237 = vadd.f32 %v228, %v232
  %v238 = vadd.f32 %v229, %v232
  %v239 = vadd.f32 %v230, %v232
  %v240 = vadd.f32 %v231, %v232
  %v241 = vmax.f32 %v233, 0.0
  %v242 = vmax.f32 %v234, 0.0
  %v243 = vmax.f32 %v235, 0.0
  %v244 = vmax.f32 %v236, 0.0
  %v245 = vmax.f32 %v237, 0.0
  %v246 = vmax.f32 %v238, 0.0
  %v247 = vmax.f32 %v239, 0.0
  %v248 = vmax.f32 %v240, 0.0
  %v249 = vstv %s76
  %v250 = vmul.f32 %v249, %v241
  %v251 = vmul.f32 %v249, %v242
  %v252 = vmul.f32 %v249, %v243
  %v253 = vmul.f32 %v249, %v244
  %v254 = vmul.f32 %v249, %v245
  %v255 = vmul.f32 %v249, %v246
  %v256 = vmul.f32 %v249, %v247
  %v257 = vmul.f32 %v249, %v248
  %v258 = vstv %s52
  %v259 = vmul.f32 %v110, %v258
  %v260 = vmul.f32 %v111, %v258
  %v261 = vmul.f32 %v112, %v258
  %v262 = vmul.f32 %v113, %v258
  %v263 = vmul.f32 %v114, %v258
  %v264 = vmul.f32 %v115, %v258
  %v265 = vmul.f32 %v116, %v258
  %v266 = vmul.f32 %v117, %v258
  %v267 = vstv %s60
  %v268 = vadd.f32 %v259, %v267
  %v269 = vadd.f32 %v260, %v267
  %v270 = vadd.f32 %v261, %v267
  %v271 = vadd.f32 %v262, %v267
  %v272 = vadd.f32 %v263, %v267
  %v273 = vadd.f32 %v264, %v267
  %v274 = vadd.f32 %v265, %v267
  %v275 = vadd.f32 %v266, %v267
  %v276 = vmax.f32 %v268, 0.0
  %v277 = vmax.f32 %v269, 0.0
  %v278 = vmax.f32 %v270, 0.0
  %v279 = vmax.f32 %v271, 0.0
  %v280 = vmax.f32 %v272, 0.0
  %v281 = vmax.f32 %v273, 0.0
  %v282 = vmax.f32 %v274, 0.0
  %v283 = vmax.f32 %v275, 0.0
  %v284 = vstv %s77
  %v285 = vmul.f32 %v284, %v276
  %v286 = vmul.f32 %v284, %v277
  %v287 = vmul.f32 %v284, %v278
  %v288 = vmul.f32 %v284, %v279
  %v289 = vmul.f32 %v284, %v280
  %v290 = vmul.f32 %v284, %v281
  %v291 = vmul.f32 %v284, %v282
  %v292 = vmul.f32 %v284, %v283
  %v293 = vstv %s53
  %v294 = vmul.f32 %v110, %v293
  %v295 = vmul.f32 %v111, %v293
  %v296 = vmul.f32 %v112, %v293
  %v297 = vmul.f32 %v113, %v293
  %v298 = vmul.f32 %v114, %v293
  %v299 = vmul.f32 %v115, %v293
  %v300 = vmul.f32 %v116, %v293
  %v301 = vmul.f32 %v117, %v293
  %v302 = vstv %s61
  %v303 = vadd.f32 %v294, %v302
  %v304 = vadd.f32 %v295, %v302
  %v305 = vadd.f32 %v296, %v302
  %v306 = vadd.f32 %v297, %v302
  %v307 = vadd.f32 %v298, %v302
  %v308 = vadd.f32 %v299, %v302
  %v309 = vadd.f32 %v300, %v302
  %v310 = vadd.f32 %v301, %v302
  %v311 = vmax.f32 %v303, 0.0
  %v312 = vmax.f32 %v304, 0.0
  %v313 = vmax.f32 %v305, 0.0
  %v314 = vmax.f32 %v306, 0.0
  %v315 = vmax.f32 %v307, 0.0
  %v316 = vmax.f32 %v308, 0.0
  %v317 = vmax.f32 %v309, 0.0
  %v318 = vmax.f32 %v310, 0.0
  %v319 = vstv %s78
  %v320 = vmul.f32 %v319, %v311
  %v321 = vmul.f32 %v319, %v312
  %v322 = vmul.f32 %v319, %v313
  %v323 = vmul.f32 %v319, %v314
  %v324 = vmul.f32 %v319, %v315
  %v325 = vmul.f32 %v319, %v316
  %v326 = vmul.f32 %v319, %v317
  %v327 = vmul.f32 %v319, %v318
  %v328 = vstv %s54
  %v329 = vmul.f32 %v110, %v328
  %v330 = vmul.f32 %v111, %v328
  %v331 = vmul.f32 %v112, %v328
  %v332 = vmul.f32 %v113, %v328
  %v333 = vmul.f32 %v114, %v328
  %v334 = vmul.f32 %v115, %v328
  %v335 = vmul.f32 %v116, %v328
  %v336 = vmul.f32 %v117, %v328
  %v337 = vstv %s62
  %v338 = vadd.f32 %v329, %v337
  %v339 = vadd.f32 %v330, %v337
  %v340 = vadd.f32 %v331, %v337
  %v341 = vadd.f32 %v332, %v337
  %v342 = vadd.f32 %v333, %v337
  %v343 = vadd.f32 %v334, %v337
  %v344 = vadd.f32 %v335, %v337
  %v345 = vadd.f32 %v336, %v337
  %v346 = vmax.f32 %v338, 0.0
  %v347 = vmax.f32 %v339, 0.0
  %v348 = vmax.f32 %v340, 0.0
  %v349 = vmax.f32 %v341, 0.0
  %v350 = vmax.f32 %v342, 0.0
  %v351 = vmax.f32 %v343, 0.0
  %v352 = vmax.f32 %v344, 0.0
  %v353 = vmax.f32 %v345, 0.0
  %v354 = vstv %s79
  %v355 = vmul.f32 %v354, %v346
  %v356 = vmul.f32 %v354, %v347
  %v357 = vmul.f32 %v354, %v348
  %v358 = vmul.f32 %v354, %v349
  %v359 = vmul.f32 %v354, %v350
  %v360 = vmul.f32 %v354, %v351
  %v361 = vmul.f32 %v354, %v352
  %v362 = vmul.f32 %v354, %v353
  %v363 = vstv %s55
  %v364 = vmul.f32 %v110, %v363
  %v365 = vmul.f32 %v111, %v363
  %v366 = vmul.f32 %v112, %v363
  %v367 = vmul.f32 %v113, %v363
  %v368 = vmul.f32 %v114, %v363
  %v369 = vmul.f32 %v115, %v363
  %v370 = vmul.f32 %v116, %v363
  %v371 = vmul.f32 %v117, %v363
  %v372 = vstv %s63
  %v373 = vadd.f32 %v364, %v372
  %v374 = vadd.f32 %v365, %v372
  %v375 = vadd.f32 %v366, %v372
  %v376 = vadd.f32 %v367, %v372
  %v377 = vadd.f32 %v368, %v372
  %v378 = vadd.f32 %v369, %v372
  %v379 = vadd.f32 %v370, %v372
  %v380 = vadd.f32 %v371, %v372
  %v381 = vmax.f32 %v373, 0.0
  %v382 = vmax.f32 %v374, 0.0
  %v383 = vmax.f32 %v375, 0.0
  %v384 = vmax.f32 %v376, 0.0
  %v385 = vmax.f32 %v377, 0.0
  %v386 = vmax.f32 %v378, 0.0
  %v387 = vmax.f32 %v379, 0.0
  %v388 = vmax.f32 %v380, 0.0
  %v389 = vstv %s80
  %v390 = vmul.f32 %v389, %v381
  %v391 = vmul.f32 %v389, %v382
  %v392 = vmul.f32 %v389, %v383
  %v393 = vmul.f32 %v389, %v384
  %v394 = vmul.f32 %v389, %v385
  %v395 = vmul.f32 %v389, %v386
  %v396 = vmul.f32 %v389, %v387
  %v397 = vmul.f32 %v389, %v388
  %v398 = vadd.f32 %v145, %v180
  %v399 = vadd.f32 %v146, %v181
  %v400 = vadd.f32 %v147, %v182
  %v401 = vadd.f32 %v148, %v183
  %v402 = vadd.f32 %v149, %v184
  %v403 = vadd.f32 %v150, %v185
  %v404 = vadd.f32 %v151, %v186
  %v405 = vadd.f32 %v152, %v187
  %v406 = vadd.f32 %v215, %v250
  %v407 = vadd.f32 %v216, %v251
  %v408 = vadd.f32 %v217, %v252
  %v409 = vadd.f32 %v218, %v253
  %v410 = vadd.f32 %v219, %v254
  %v411 = vadd.f32 %v220, %v255
  %v412 = vadd.f32 %v221, %v256
  %v413 = vadd.f32 %v222, %v257
  %v414 = vadd.f32 %v285, %v320
  %v415 = vadd.f32 %v286, %v321
  %v416 = vadd.f32 %v287, %v322
  %v417 = vadd.f32 %v288, %v323
  %v418 = vadd.f32 %v289, %v324
  %v419 = vadd.f32 %v290, %v325
  %v420 = vadd.f32 %v291, %v326
  %v421 = vadd.f32 %v292, %v327
  %v422 = vadd.f32 %v355, %v390
  %v423 = vadd.f32 %v356, %v391
  %v424 = vadd.f32 %v357, %v392
  %v425 = vadd.f32 %v358, %v393
  %v426 = vadd.f32 %v359, %v394
  %v427 = vadd.f32 %v360, %v395
  %v428 = vadd.f32 %v361, %v396
  %v429 = vadd.f32 %v362, %v397
  %v430 = vadd.f32 %v398, %v406
  %v431 = vadd.f32 %v399, %v407
  %v432 = vadd.f32 %v400, %v408
  %v433 = vadd.f32 %v401, %v409
  %v434 = vadd.f32 %v402, %v410
  %v435 = vadd.f32 %v403, %v411
  %v436 = vadd.f32 %v404, %v412
  %v437 = vadd.f32 %v405, %v413
  %v438 = vadd.f32 %v414, %v422
  %v439 = vadd.f32 %v415, %v423
  %v440 = vadd.f32 %v416, %v424
  %v441 = vadd.f32 %v417, %v425
  %v442 = vadd.f32 %v418, %v426
  %v443 = vadd.f32 %v419, %v427
  %v444 = vadd.f32 %v420, %v428
  %v445 = vadd.f32 %v421, %v429
  %v446 = vadd.f32 %v430, %v438
  %v447 = vadd.f32 %v431, %v439
  %v448 = vadd.f32 %v432, %v440
  %v449 = vadd.f32 %v433, %v441
  %v450 = vadd.f32 %v434, %v442
  %v451 = vadd.f32 %v435, %v443
  %v452 = vadd.f32 %v436, %v444
  %v453 = vadd.f32 %v437, %v445
  %v454 = vstv %s81
  %v455 = vadd.f32 %v446, %v454
  %v456 = vadd.f32 %v447, %v454
  %v457 = vadd.f32 %v448, %v454
  %v458 = vadd.f32 %v449, %v454
  %v459 = vadd.f32 %v450, %v454
  %v460 = vadd.f32 %v451, %v454
  %v461 = vadd.f32 %v452, %v454
  %v462 = vadd.f32 %v453, %v454
  %v463 = vmin.f32 %v455, 0.0
  %v464 = vmin.f32 %v456, 0.0
  %v465 = vmin.f32 %v457, 0.0
  %v466 = vmin.f32 %v458, 0.0
  %v467 = vmin.f32 %v459, 0.0
  %v468 = vmin.f32 %v460, 0.0
  %v469 = vmin.f32 %v461, 0.0
  %v470 = vmin.f32 %v462, 0.0
  %v471 = vmul.f32 %v463, 1.442695
  %v472 = vpow.pop %v471
  %v473 = vmul.f32 %v464, 1.442695
  %v474 = vpow.pop %v473
  %v475 = vmul.f32 %v465, 1.442695
  %v476 = vpow.pop %v475
  %v477 = vmul.f32 %v466, 1.442695
  %v478 = vpow.pop %v477
  %v479 = vmul.f32 %v467, 1.442695
  %v480 = vpow.pop %v479
  %v481 = vmul.f32 %v468, 1.442695
  %v482 = vpow.pop %v481
  %v483 = vmul.f32 %v469, 1.442695
  %v484 = vpow.pop %v483
  %v485 = vmul.f32 %v470, 1.442695
  %v486 = vpow.pop %v485
  %s487 = smul.addr %s107, 8
  %s488 = scalar_lea.vmem %s1, %s487
  %v489 = vld [vmem:[%s488] sm:$0xff]
  %v490 = vld [vmem:[%s488 + $0x8] sm:$0xff]
  %v491 = vld [vmem:[%s488 + $0x10] sm:$0xff]
  %v492 = vld [vmem:[%s488 + $0x18] sm:$0xff]
  %v493 = vld [vmem:[%s488 + $0x20] sm:$0xff]
  %v494 = vld [vmem:[%s488 + $0x28] sm:$0xff]
  %v495 = vld [vmem:[%s488 + $0x30] sm:$0xff]
  %v496 = vld [vmem:[%s488 + $0x38] sm:$0xff]
  %v497 = vstv %s23
  %v498 = vmul.f32 %v489, %v497
  %v499 = vmul.f32 %v490, %v497
  %v500 = vmul.f32 %v491, %v497
  %v501 = vmul.f32 %v492, %v497
  %v502 = vmul.f32 %v493, %v497
  %v503 = vmul.f32 %v494, %v497
  %v504 = vmul.f32 %v495, %v497
  %v505 = vmul.f32 %v496, %v497
  %v506 = vstv %s31
  %v507 = vadd.f32 %v498, %v506
  %v508 = vadd.f32 %v499, %v506
  %v509 = vadd.f32 %v500, %v506
  %v510 = vadd.f32 %v501, %v506
  %v511 = vadd.f32 %v502, %v506
  %v512 = vadd.f32 %v503, %v506
  %v513 = vadd.f32 %v504, %v506
  %v514 = vadd.f32 %v505, %v506
  %v515 = vmax.f32 %v507, 0.0
  %v516 = vmax.f32 %v508, 0.0
  %v517 = vmax.f32 %v509, 0.0
  %v518 = vmax.f32 %v510, 0.0
  %v519 = vmax.f32 %v511, 0.0
  %v520 = vmax.f32 %v512, 0.0
  %v521 = vmax.f32 %v513, 0.0
  %v522 = vmax.f32 %v514, 0.0
  %v523 = vstv %s39
  %v524 = vmul.f32 %v523, %v515
  %v525 = vmul.f32 %v523, %v516
  %v526 = vmul.f32 %v523, %v517
  %v527 = vmul.f32 %v523, %v518
  %v528 = vmul.f32 %v523, %v519
  %v529 = vmul.f32 %v523, %v520
  %v530 = vmul.f32 %v523, %v521
  %v531 = vmul.f32 %v523, %v522
  %v532 = vstv %s24
  %v533 = vmul.f32 %v489, %v532
  %v534 = vmul.f32 %v490, %v532
  %v535 = vmul.f32 %v491, %v532
  %v536 = vmul.f32 %v492, %v532
  %v537 = vmul.f32 %v493, %v532
  %v538 = vmul.f32 %v494, %v532
  %v539 = vmul.f32 %v495, %v532
  %v540 = vmul.f32 %v496, %v532
  %v541 = vstv %s32
  %v542 = vadd.f32 %v533, %v541
  %v543 = vadd.f32 %v534, %v541
  %v544 = vadd.f32 %v535, %v541
  %v545 = vadd.f32 %v536, %v541
  %v546 = vadd.f32 %v537, %v541
  %v547 = vadd.f32 %v538, %v541
  %v548 = vadd.f32 %v539, %v541
  %v549 = vadd.f32 %v540, %v541
  %v550 = vmax.f32 %v542, 0.0
  %v551 = vmax.f32 %v543, 0.0
  %v552 = vmax.f32 %v544, 0.0
  %v553 = vmax.f32 %v545, 0.0
  %v554 = vmax.f32 %v546, 0.0
  %v555 = vmax.f32 %v547, 0.0
  %v556 = vmax.f32 %v548, 0.0
  %v557 = vmax.f32 %v549, 0.0
  %v558 = vstv %s40
  %v559 = vmul.f32 %v558, %v550
  %v560 = vmul.f32 %v558, %v551
  %v561 = vmul.f32 %v558, %v552
  %v562 = vmul.f32 %v558, %v553
  %v563 = vmul.f32 %v558, %v554
  %v564 = vmul.f32 %v558, %v555
  %v565 = vmul.f32 %v558, %v556
  %v566 = vmul.f32 %v558, %v557
  %v567 = vstv %s25
  %v568 = vmul.f32 %v489, %v567
  %v569 = vmul.f32 %v490, %v567
  %v570 = vmul.f32 %v491, %v567
  %v571 = vmul.f32 %v492, %v567
  %v572 = vmul.f32 %v493, %v567
  %v573 = vmul.f32 %v494, %v567
  %v574 = vmul.f32 %v495, %v567
  %v575 = vmul.f32 %v496, %v567
  %v576 = vstv %s33
  %v577 = vadd.f32 %v568, %v576
  %v578 = vadd.f32 %v569, %v576
  %v579 = vadd.f32 %v570, %v576
  %v580 = vadd.f32 %v571, %v576
  %v581 = vadd.f32 %v572, %v576
  %v582 = vadd.f32 %v573, %v576
  %v583 = vadd.f32 %v574, %v576
  %v584 = vadd.f32 %v575, %v576
  %v585 = vmax.f32 %v577, 0.0
  %v586 = vmax.f32 %v578, 0.0
  %v587 = vmax.f32 %v579, 0.0
  %v588 = vmax.f32 %v580, 0.0
  %v589 = vmax.f32 %v581, 0.0
  %v590 = vmax.f32 %v582, 0.0
  %v591 = vmax.f32 %v583, 0.0
  %v592 = vmax.f32 %v584, 0.0
  %v593 = vstv %s41
  %v594 = vmul.f32 %v593, %v585
  %v595 = vmul.f32 %v593, %v586
  %v596 = vmul.f32 %v593, %v587
  %v597 = vmul.f32 %v593, %v588
  %v598 = vmul.f32 %v593, %v589
  %v599 = vmul.f32 %v593, %v590
  %v600 = vmul.f32 %v593, %v591
  %v601 = vmul.f32 %v593, %v592
  %v602 = vstv %s26
  %v603 = vmul.f32 %v489, %v602
  %v604 = vmul.f32 %v490, %v602
  %v605 = vmul.f32 %v491, %v602
  %v606 = vmul.f32 %v492, %v602
  %v607 = vmul.f32 %v493, %v602
  %v608 = vmul.f32 %v494, %v602
  %v609 = vmul.f32 %v495, %v602
  %v610 = vmul.f32 %v496, %v602
  %v611 = vstv %s34
  %v612 = vadd.f32 %v603, %v611
  %v613 = vadd.f32 %v604, %v611
  %v614 = vadd.f32 %v605, %v611
  %v615 = vadd.f32 %v606, %v611
  %v616 = vadd.f32 %v607, %v611
  %v617 = vadd.f32 %v608, %v611
  %v618 = vadd.f32 %v609, %v611
  %v619 = vadd.f32 %v610, %v611
  %v620 = vmax.f32 %v612, 0.0
  %v621 = vmax.f32 %v613, 0.0
  %v622 = vmax.f32 %v614, 0.0
  %v623 = vmax.f32 %v615, 0.0
  %v624 = vmax.f32 %v616, 0.0
  %v625 = vmax.f32 %v617, 0.0
  %v626 = vmax.f32 %v618, 0.0
  %v627 = vmax.f32 %v619, 0.0
  %v628 = vstv %s42
  %v629 = vmul.f32 %v628, %v620
  %v630 = vmul.f32 %v628, %v621
  %v631 = vmul.f32 %v628, %v622
  %v632 = vmul.f32 %v628, %v623
  %v633 = vmul.f32 %v628, %v624
  %v634 = vmul.f32 %v628, %v625
  %v635 = vmul.f32 %v628, %v626
  %v636 = vmul.f32 %v628, %v627
  %v637 = vstv %s27
  %v638 = vmul.f32 %v489, %v637
  %v639 = vmul.f32 %v490, %v637
  %v640 = vmul.f32 %v491, %v637
  %v641 = vmul.f32 %v492, %v637
  %v642 = vmul.f32 %v493, %v637
  %v643 = vmul.f32 %v494, %v637
  %v644 = vmul.f32 %v495, %v637
  %v645 = vmul.f32 %v496, %v637
  %v646 = vstv %s35
  %v647 = vadd.f32 %v638, %v646
  %v648 = vadd.f32 %v639, %v646
  %v649 = vadd.f32 %v640, %v646
  %v650 = vadd.f32 %v641, %v646
  %v651 = vadd.f32 %v642, %v646
  %v652 = vadd.f32 %v643, %v646
  %v653 = vadd.f32 %v644, %v646
  %v654 = vadd.f32 %v645, %v646
  %v655 = vmax.f32 %v647, 0.0
  %v656 = vmax.f32 %v648, 0.0
  %v657 = vmax.f32 %v649, 0.0
  %v658 = vmax.f32 %v650, 0.0
  %v659 = vmax.f32 %v651, 0.0
  %v660 = vmax.f32 %v652, 0.0
  %v661 = vmax.f32 %v653, 0.0
  %v662 = vmax.f32 %v654, 0.0
  %v663 = vstv %s43
  %v664 = vmul.f32 %v663, %v655
  %v665 = vmul.f32 %v663, %v656
  %v666 = vmul.f32 %v663, %v657
  %v667 = vmul.f32 %v663, %v658
  %v668 = vmul.f32 %v663, %v659
  %v669 = vmul.f32 %v663, %v660
  %v670 = vmul.f32 %v663, %v661
  %v671 = vmul.f32 %v663, %v662
  %v672 = vstv %s28
  %v673 = vmul.f32 %v489, %v672
  %v674 = vmul.f32 %v490, %v672
  %v675 = vmul.f32 %v491, %v672
  %v676 = vmul.f32 %v492, %v672
  %v677 = vmul.f32 %v493, %v672
  %v678 = vmul.f32 %v494, %v672
  %v679 = vmul.f32 %v495, %v672
  %v680 = vmul.f32 %v496, %v672
  %v681 = vstv %s36
  %v682 = vadd.f32 %v673, %v681
  %v683 = vadd.f32 %v674, %v681
  %v684 = vadd.f32 %v675, %v681
  %v685 = vadd.f32 %v676, %v681
  %v686 = vadd.f32 %v677, %v681
  %v687 = vadd.f32 %v678, %v681
  %v688 = vadd.f32 %v679, %v681
  %v689 = vadd.f32 %v680, %v681
  %v690 = vmax.f32 %v682, 0.0
  %v691 = vmax.f32 %v683, 0.0
  %v692 = vmax.f32 %v684, 0.0
  %v693 = vmax.f32 %v685, 0.0
  %v694 = vmax.f32 %v686, 0.0
  %v695 = vmax.f32 %v687, 0.0
  %v696 = vmax.f32 %v688, 0.0
  %v697 = vmax.f32 %v689, 0.0
  %v698 = vstv %s44
  %v699 = vmul.f32 %v698, %v690
  %v700 = vmul.f32 %v698, %v691
  %v701 = vmul.f32 %v698, %v692
  %v702 = vmul.f32 %v698, %v693
  %v703 = vmul.f32 %v698, %v694
  %v704 = vmul.f32 %v698, %v695
  %v705 = vmul.f32 %v698, %v696
  %v706 = vmul.f32 %v698, %v697
  %v707 = vstv %s29
  %v708 = vmul.f32 %v489, %v707
  %v709 = vmul.f32 %v490, %v707
  %v710 = vmul.f32 %v491, %v707
  %v711 = vmul.f32 %v492, %v707
  %v712 = vmul.f32 %v493, %v707
  %v713 = vmul.f32 %v494, %v707
  %v714 = vmul.f32 %v495, %v707
  %v715 = vmul.f32 %v496, %v707
  %v716 = vstv %s37
  %v717 = vadd.f32 %v708, %v716
  %v718 = vadd.f32 %v709, %v716
  %v719 = vadd.f32 %v710, %v716
  %v720 = vadd.f32 %v711, %v716
  %v721 = vadd.f32 %v712, %v716
  %v722 = vadd.f32 %v713, %v716
  %v723 = vadd.f32 %v714, %v716
  %v724 = vadd.f32 %v715, %v716
  %v725 = vmax.f32 %v717, 0.0
  %v726 = vmax.f32 %v718, 0.0
  %v727 = vmax.f32 %v719, 0.0
  %v728 = vmax.f32 %v720, 0.0
  %v729 = vmax.f32 %v721, 0.0
  %v730 = vmax.f32 %v722, 0.0
  %v731 = vmax.f32 %v723, 0.0
  %v732 = vmax.f32 %v724, 0.0
  %v733 = vstv %s45
  %v734 = vmul.f32 %v733, %v725
  %v735 = vmul.f32 %v733, %v726
  %v736 = vmul.f32 %v733, %v727
  %v737 = vmul.f32 %v733, %v728
  %v738 = vmul.f32 %v733, %v729
  %v739 = vmul.f32 %v733, %v730
  %v740 = vmul.f32 %v733, %v731
  %v741 = vmul.f32 %v733, %v732
  %v742 = vstv %s30
  %v743 = vmul.f32 %v489, %v742
  %v744 = vmul.f32 %v490, %v742
  %v745 = vmul.f32 %v491, %v742
  %v746 = vmul.f32 %v492, %v742
  %v747 = vmul.f32 %v493, %v742
  %v748 = vmul.f32 %v494, %v742
  %v749 = vmul.f32 %v495, %v742
  %v750 = vmul.f32 %v496, %v742
  %v751 = vstv %s38
  %v752 = vadd.f32 %v743, %v751
  %v753 = vadd.f32 %v744, %v751
  %v754 = vadd.f32 %v745, %v751
  %v755 = vadd.f32 %v746, %v751
  %v756 = vadd.f32 %v747, %v751
  %v757 = vadd.f32 %v748, %v751
  %v758 = vadd.f32 %v749, %v751
  %v759 = vadd.f32 %v750, %v751
  %v760 = vmax.f32 %v752, 0.0
  %v761 = vmax.f32 %v753, 0.0
  %v762 = vmax.f32 %v754, 0.0
  %v763 = vmax.f32 %v755, 0.0
  %v764 = vmax.f32 %v756, 0.0
  %v765 = vmax.f32 %v757, 0.0
  %v766 = vmax.f32 %v758, 0.0
  %v767 = vmax.f32 %v759, 0.0
  %v768 = vstv %s46
  %v769 = vmul.f32 %v768, %v760
  %v770 = vmul.f32 %v768, %v761
  %v771 = vmul.f32 %v768, %v762
  %v772 = vmul.f32 %v768, %v763
  %v773 = vmul.f32 %v768, %v764
  %v774 = vmul.f32 %v768, %v765
  %v775 = vmul.f32 %v768, %v766
  %v776 = vmul.f32 %v768, %v767
  %v777 = vadd.f32 %v524, %v559
  %v778 = vadd.f32 %v525, %v560
  %v779 = vadd.f32 %v526, %v561
  %v780 = vadd.f32 %v527, %v562
  %v781 = vadd.f32 %v528, %v563
  %v782 = vadd.f32 %v529, %v564
  %v783 = vadd.f32 %v530, %v565
  %v784 = vadd.f32 %v531, %v566
  %v785 = vadd.f32 %v594, %v629
  %v786 = vadd.f32 %v595, %v630
  %v787 = vadd.f32 %v596, %v631
  %v788 = vadd.f32 %v597, %v632
  %v789 = vadd.f32 %v598, %v633
  %v790 = vadd.f32 %v599, %v634
  %v791 = vadd.f32 %v600, %v635
  %v792 = vadd.f32 %v601, %v636
  %v793 = vadd.f32 %v664, %v699
  %v794 = vadd.f32 %v665, %v700
  %v795 = vadd.f32 %v666, %v701
  %v796 = vadd.f32 %v667, %v702
  %v797 = vadd.f32 %v668, %v703
  %v798 = vadd.f32 %v669, %v704
  %v799 = vadd.f32 %v670, %v705
  %v800 = vadd.f32 %v671, %v706
  %v801 = vadd.f32 %v734, %v769
  %v802 = vadd.f32 %v735, %v770
  %v803 = vadd.f32 %v736, %v771
  %v804 = vadd.f32 %v737, %v772
  %v805 = vadd.f32 %v738, %v773
  %v806 = vadd.f32 %v739, %v774
  %v807 = vadd.f32 %v740, %v775
  %v808 = vadd.f32 %v741, %v776
  %v809 = vadd.f32 %v777, %v785
  %v810 = vadd.f32 %v778, %v786
  %v811 = vadd.f32 %v779, %v787
  %v812 = vadd.f32 %v780, %v788
  %v813 = vadd.f32 %v781, %v789
  %v814 = vadd.f32 %v782, %v790
  %v815 = vadd.f32 %v783, %v791
  %v816 = vadd.f32 %v784, %v792
  %v817 = vadd.f32 %v793, %v801
  %v818 = vadd.f32 %v794, %v802
  %v819 = vadd.f32 %v795, %v803
  %v820 = vadd.f32 %v796, %v804
  %v821 = vadd.f32 %v797, %v805
  %v822 = vadd.f32 %v798, %v806
  %v823 = vadd.f32 %v799, %v807
  %v824 = vadd.f32 %v800, %v808
  %v825 = vadd.f32 %v809, %v817
  %v826 = vadd.f32 %v810, %v818
  %v827 = vadd.f32 %v811, %v819
  %v828 = vadd.f32 %v812, %v820
  %v829 = vadd.f32 %v813, %v821
  %v830 = vadd.f32 %v814, %v822
  %v831 = vadd.f32 %v815, %v823
  %v832 = vadd.f32 %v816, %v824
  %v833 = vstv %s47
  %v834 = vadd.f32 %v825, %v833
  %v835 = vadd.f32 %v826, %v833
  %v836 = vadd.f32 %v827, %v833
  %v837 = vadd.f32 %v828, %v833
  %v838 = vadd.f32 %v829, %v833
  %v839 = vadd.f32 %v830, %v833
  %v840 = vadd.f32 %v831, %v833
  %v841 = vadd.f32 %v832, %v833
  %v842 = vmul.f32 %v834, %v472
  %v843 = vmul.f32 %v835, %v474
  %v844 = vmul.f32 %v836, %v476
  %v845 = vmul.f32 %v837, %v478
  %v846 = vmul.f32 %v838, %v480
  %v847 = vmul.f32 %v839, %v482
  %v848 = vmul.f32 %v840, %v484
  %v849 = vmul.f32 %v841, %v486
  %s850 = smul.addr %s107, 8
  %s851 = scalar_lea.vmem %s3, %s850
  %v852 = vld [vmem:[%s851] sm:$0xff]
  %v853 = vld [vmem:[%s851 + $0x8] sm:$0xff]
  %v854 = vld [vmem:[%s851 + $0x10] sm:$0xff]
  %v855 = vld [vmem:[%s851 + $0x18] sm:$0xff]
  %v856 = vld [vmem:[%s851 + $0x20] sm:$0xff]
  %v857 = vld [vmem:[%s851 + $0x28] sm:$0xff]
  %v858 = vld [vmem:[%s851 + $0x30] sm:$0xff]
  %v859 = vld [vmem:[%s851 + $0x38] sm:$0xff]
  %v860 = vstv %s82
  %v861 = vmul.f32 %v852, %v860
  %v862 = vmul.f32 %v853, %v860
  %v863 = vmul.f32 %v854, %v860
  %v864 = vmul.f32 %v855, %v860
  %v865 = vmul.f32 %v856, %v860
  %v866 = vmul.f32 %v857, %v860
  %v867 = vmul.f32 %v858, %v860
  %v868 = vmul.f32 %v859, %v860
  %v869 = vstv %s90
  %v870 = vadd.f32 %v861, %v869
  %v871 = vadd.f32 %v862, %v869
  %v872 = vadd.f32 %v863, %v869
  %v873 = vadd.f32 %v864, %v869
  %v874 = vadd.f32 %v865, %v869
  %v875 = vadd.f32 %v866, %v869
  %v876 = vadd.f32 %v867, %v869
  %v877 = vadd.f32 %v868, %v869
  %v878 = vmax.f32 %v870, 0.0
  %v879 = vmax.f32 %v871, 0.0
  %v880 = vmax.f32 %v872, 0.0
  %v881 = vmax.f32 %v873, 0.0
  %v882 = vmax.f32 %v874, 0.0
  %v883 = vmax.f32 %v875, 0.0
  %v884 = vmax.f32 %v876, 0.0
  %v885 = vmax.f32 %v877, 0.0
  %v886 = vstv %s98
  %v887 = vmul.f32 %v886, %v878
  %v888 = vmul.f32 %v886, %v879
  %v889 = vmul.f32 %v886, %v880
  %v890 = vmul.f32 %v886, %v881
  %v891 = vmul.f32 %v886, %v882
  %v892 = vmul.f32 %v886, %v883
  %v893 = vmul.f32 %v886, %v884
  %v894 = vmul.f32 %v886, %v885
  %v895 = vstv %s83
  %v896 = vmul.f32 %v852, %v895
  %v897 = vmul.f32 %v853, %v895
  %v898 = vmul.f32 %v854, %v895
  %v899 = vmul.f32 %v855, %v895
  %v900 = vmul.f32 %v856, %v895
  %v901 = vmul.f32 %v857, %v895
  %v902 = vmul.f32 %v858, %v895
  %v903 = vmul.f32 %v859, %v895
  %v904 = vstv %s91
  %v905 = vadd.f32 %v896, %v904
  %v906 = vadd.f32 %v897, %v904
  %v907 = vadd.f32 %v898, %v904
  %v908 = vadd.f32 %v899, %v904
  %v909 = vadd.f32 %v900, %v904
  %v910 = vadd.f32 %v901, %v904
  %v911 = vadd.f32 %v902, %v904
  %v912 = vadd.f32 %v903, %v904
  %v913 = vmax.f32 %v905, 0.0
  %v914 = vmax.f32 %v906, 0.0
  %v915 = vmax.f32 %v907, 0.0
  %v916 = vmax.f32 %v908, 0.0
  %v917 = vmax.f32 %v909, 0.0
  %v918 = vmax.f32 %v910, 0.0
  %v919 = vmax.f32 %v911, 0.0
  %v920 = vmax.f32 %v912, 0.0
  %v921 = vstv %s99
  %v922 = vmul.f32 %v921, %v913
  %v923 = vmul.f32 %v921, %v914
  %v924 = vmul.f32 %v921, %v915
  %v925 = vmul.f32 %v921, %v916
  %v926 = vmul.f32 %v921, %v917
  %v927 = vmul.f32 %v921, %v918
  %v928 = vmul.f32 %v921, %v919
  %v929 = vmul.f32 %v921, %v920
  %v930 = vstv %s84
  %v931 = vmul.f32 %v852, %v930
  %v932 = vmul.f32 %v853, %v930
  %v933 = vmul.f32 %v854, %v930
  %v934 = vmul.f32 %v855, %v930
  %v935 = vmul.f32 %v856, %v930
  %v936 = vmul.f32 %v857, %v930
  %v937 = vmul.f32 %v858, %v930
  %v938 = vmul.f32 %v859, %v930
  %v939 = vstv %s92
  %v940 = vadd.f32 %v931, %v939
  %v941 = vadd.f32 %v932, %v939
  %v942 = vadd.f32 %v933, %v939
  %v943 = vadd.f32 %v934, %v939
  %v944 = vadd.f32 %v935, %v939
  %v945 = vadd.f32 %v936, %v939
  %v946 = vadd.f32 %v937, %v939
  %v947 = vadd.f32 %v938, %v939
  %v948 = vmax.f32 %v940, 0.0
  %v949 = vmax.f32 %v941, 0.0
  %v950 = vmax.f32 %v942, 0.0
  %v951 = vmax.f32 %v943, 0.0
  %v952 = vmax.f32 %v944, 0.0
  %v953 = vmax.f32 %v945, 0.0
  %v954 = vmax.f32 %v946, 0.0
  %v955 = vmax.f32 %v947, 0.0
  %v956 = vstv %s100
  %v957 = vmul.f32 %v956, %v948
  %v958 = vmul.f32 %v956, %v949
  %v959 = vmul.f32 %v956, %v950
  %v960 = vmul.f32 %v956, %v951
  %v961 = vmul.f32 %v956, %v952
  %v962 = vmul.f32 %v956, %v953
  %v963 = vmul.f32 %v956, %v954
  %v964 = vmul.f32 %v956, %v955
  %v965 = vstv %s85
  %v966 = vmul.f32 %v852, %v965
  %v967 = vmul.f32 %v853, %v965
  %v968 = vmul.f32 %v854, %v965
  %v969 = vmul.f32 %v855, %v965
  %v970 = vmul.f32 %v856, %v965
  %v971 = vmul.f32 %v857, %v965
  %v972 = vmul.f32 %v858, %v965
  %v973 = vmul.f32 %v859, %v965
  %v974 = vstv %s93
  %v975 = vadd.f32 %v966, %v974
  %v976 = vadd.f32 %v967, %v974
  %v977 = vadd.f32 %v968, %v974
  %v978 = vadd.f32 %v969, %v974
  %v979 = vadd.f32 %v970, %v974
  %v980 = vadd.f32 %v971, %v974
  %v981 = vadd.f32 %v972, %v974
  %v982 = vadd.f32 %v973, %v974
  %v983 = vmax.f32 %v975, 0.0
  %v984 = vmax.f32 %v976, 0.0
  %v985 = vmax.f32 %v977, 0.0
  %v986 = vmax.f32 %v978, 0.0
  %v987 = vmax.f32 %v979, 0.0
  %v988 = vmax.f32 %v980, 0.0
  %v989 = vmax.f32 %v981, 0.0
  %v990 = vmax.f32 %v982, 0.0
  %v991 = vstv %s101
  %v992 = vmul.f32 %v991, %v983
  %v993 = vmul.f32 %v991, %v984
  %v994 = vmul.f32 %v991, %v985
  %v995 = vmul.f32 %v991, %v986
  %v996 = vmul.f32 %v991, %v987
  %v997 = vmul.f32 %v991, %v988
  %v998 = vmul.f32 %v991, %v989
  %v999 = vmul.f32 %v991, %v990
  %v1000 = vstv %s86
  %v1001 = vmul.f32 %v852, %v1000
  %v1002 = vmul.f32 %v853, %v1000
  %v1003 = vmul.f32 %v854, %v1000
  %v1004 = vmul.f32 %v855, %v1000
  %v1005 = vmul.f32 %v856, %v1000
  %v1006 = vmul.f32 %v857, %v1000
  %v1007 = vmul.f32 %v858, %v1000
  %v1008 = vmul.f32 %v859, %v1000
  %v1009 = vstv %s94
  %v1010 = vadd.f32 %v1001, %v1009
  %v1011 = vadd.f32 %v1002, %v1009
  %v1012 = vadd.f32 %v1003, %v1009
  %v1013 = vadd.f32 %v1004, %v1009
  %v1014 = vadd.f32 %v1005, %v1009
  %v1015 = vadd.f32 %v1006, %v1009
  %v1016 = vadd.f32 %v1007, %v1009
  %v1017 = vadd.f32 %v1008, %v1009
  %v1018 = vmax.f32 %v1010, 0.0
  %v1019 = vmax.f32 %v1011, 0.0
  %v1020 = vmax.f32 %v1012, 0.0
  %v1021 = vmax.f32 %v1013, 0.0
  %v1022 = vmax.f32 %v1014, 0.0
  %v1023 = vmax.f32 %v1015, 0.0
  %v1024 = vmax.f32 %v1016, 0.0
  %v1025 = vmax.f32 %v1017, 0.0
  %v1026 = vstv %s102
  %v1027 = vmul.f32 %v1026, %v1018
  %v1028 = vmul.f32 %v1026, %v1019
  %v1029 = vmul.f32 %v1026, %v1020
  %v1030 = vmul.f32 %v1026, %v1021
  %v1031 = vmul.f32 %v1026, %v1022
  %v1032 = vmul.f32 %v1026, %v1023
  %v1033 = vmul.f32 %v1026, %v1024
  %v1034 = vmul.f32 %v1026, %v1025
  %v1035 = vstv %s87
  %v1036 = vmul.f32 %v852, %v1035
  %v1037 = vmul.f32 %v853, %v1035
  %v1038 = vmul.f32 %v854, %v1035
  %v1039 = vmul.f32 %v855, %v1035
  %v1040 = vmul.f32 %v856, %v1035
  %v1041 = vmul.f32 %v857, %v1035
  %v1042 = vmul.f32 %v858, %v1035
  %v1043 = vmul.f32 %v859, %v1035
  %v1044 = vstv %s95
  %v1045 = vadd.f32 %v1036, %v1044
  %v1046 = vadd.f32 %v1037, %v1044
  %v1047 = vadd.f32 %v1038, %v1044
  %v1048 = vadd.f32 %v1039, %v1044
  %v1049 = vadd.f32 %v1040, %v1044
  %v1050 = vadd.f32 %v1041, %v1044
  %v1051 = vadd.f32 %v1042, %v1044
  %v1052 = vadd.f32 %v1043, %v1044
  %v1053 = vmax.f32 %v1045, 0.0
  %v1054 = vmax.f32 %v1046, 0.0
  %v1055 = vmax.f32 %v1047, 0.0
  %v1056 = vmax.f32 %v1048, 0.0
  %v1057 = vmax.f32 %v1049, 0.0
  %v1058 = vmax.f32 %v1050, 0.0
  %v1059 = vmax.f32 %v1051, 0.0
  %v1060 = vmax.f32 %v1052, 0.0
  %v1061 = vstv %s103
  %v1062 = vmul.f32 %v1061, %v1053
  %v1063 = vmul.f32 %v1061, %v1054
  %v1064 = vmul.f32 %v1061, %v1055
  %v1065 = vmul.f32 %v1061, %v1056
  %v1066 = vmul.f32 %v1061, %v1057
  %v1067 = vmul.f32 %v1061, %v1058
  %v1068 = vmul.f32 %v1061, %v1059
  %v1069 = vmul.f32 %v1061, %v1060
  %v1070 = vstv %s88
  %v1071 = vmul.f32 %v852, %v1070
  %v1072 = vmul.f32 %v853, %v1070
  %v1073 = vmul.f32 %v854, %v1070
  %v1074 = vmul.f32 %v855, %v1070
  %v1075 = vmul.f32 %v856, %v1070
  %v1076 = vmul.f32 %v857, %v1070
  %v1077 = vmul.f32 %v858, %v1070
  %v1078 = vmul.f32 %v859, %v1070
  %v1079 = vstv %s96
  %v1080 = vadd.f32 %v1071, %v1079
  %v1081 = vadd.f32 %v1072, %v1079
  %v1082 = vadd.f32 %v1073, %v1079
  %v1083 = vadd.f32 %v1074, %v1079
  %v1084 = vadd.f32 %v1075, %v1079
  %v1085 = vadd.f32 %v1076, %v1079
  %v1086 = vadd.f32 %v1077, %v1079
  %v1087 = vadd.f32 %v1078, %v1079
  %v1088 = vmax.f32 %v1080, 0.0
  %v1089 = vmax.f32 %v1081, 0.0
  %v1090 = vmax.f32 %v1082, 0.0
  %v1091 = vmax.f32 %v1083, 0.0
  %v1092 = vmax.f32 %v1084, 0.0
  %v1093 = vmax.f32 %v1085, 0.0
  %v1094 = vmax.f32 %v1086, 0.0
  %v1095 = vmax.f32 %v1087, 0.0
  %v1096 = vstv %s104
  %v1097 = vmul.f32 %v1096, %v1088
  %v1098 = vmul.f32 %v1096, %v1089
  %v1099 = vmul.f32 %v1096, %v1090
  %v1100 = vmul.f32 %v1096, %v1091
  %v1101 = vmul.f32 %v1096, %v1092
  %v1102 = vmul.f32 %v1096, %v1093
  %v1103 = vmul.f32 %v1096, %v1094
  %v1104 = vmul.f32 %v1096, %v1095
  %v1105 = vstv %s89
  %v1106 = vmul.f32 %v852, %v1105
  %v1107 = vmul.f32 %v853, %v1105
  %v1108 = vmul.f32 %v854, %v1105
  %v1109 = vmul.f32 %v855, %v1105
  %v1110 = vmul.f32 %v856, %v1105
  %v1111 = vmul.f32 %v857, %v1105
  %v1112 = vmul.f32 %v858, %v1105
  %v1113 = vmul.f32 %v859, %v1105
  %v1114 = vstv %s97
  %v1115 = vadd.f32 %v1106, %v1114
  %v1116 = vadd.f32 %v1107, %v1114
  %v1117 = vadd.f32 %v1108, %v1114
  %v1118 = vadd.f32 %v1109, %v1114
  %v1119 = vadd.f32 %v1110, %v1114
  %v1120 = vadd.f32 %v1111, %v1114
  %v1121 = vadd.f32 %v1112, %v1114
  %v1122 = vadd.f32 %v1113, %v1114
  %v1123 = vmax.f32 %v1115, 0.0
  %v1124 = vmax.f32 %v1116, 0.0
  %v1125 = vmax.f32 %v1117, 0.0
  %v1126 = vmax.f32 %v1118, 0.0
  %v1127 = vmax.f32 %v1119, 0.0
  %v1128 = vmax.f32 %v1120, 0.0
  %v1129 = vmax.f32 %v1121, 0.0
  %v1130 = vmax.f32 %v1122, 0.0
  %v1131 = vstv %s105
  %v1132 = vmul.f32 %v1131, %v1123
  %v1133 = vmul.f32 %v1131, %v1124
  %v1134 = vmul.f32 %v1131, %v1125
  %v1135 = vmul.f32 %v1131, %v1126
  %v1136 = vmul.f32 %v1131, %v1127
  %v1137 = vmul.f32 %v1131, %v1128
  %v1138 = vmul.f32 %v1131, %v1129
  %v1139 = vmul.f32 %v1131, %v1130
  %v1140 = vadd.f32 %v887, %v922
  %v1141 = vadd.f32 %v888, %v923
  %v1142 = vadd.f32 %v889, %v924
  %v1143 = vadd.f32 %v890, %v925
  %v1144 = vadd.f32 %v891, %v926
  %v1145 = vadd.f32 %v892, %v927
  %v1146 = vadd.f32 %v893, %v928
  %v1147 = vadd.f32 %v894, %v929
  %v1148 = vadd.f32 %v957, %v992
  %v1149 = vadd.f32 %v958, %v993
  %v1150 = vadd.f32 %v959, %v994
  %v1151 = vadd.f32 %v960, %v995
  %v1152 = vadd.f32 %v961, %v996
  %v1153 = vadd.f32 %v962, %v997
  %v1154 = vadd.f32 %v963, %v998
  %v1155 = vadd.f32 %v964, %v999
  %v1156 = vadd.f32 %v1027, %v1062
  %v1157 = vadd.f32 %v1028, %v1063
  %v1158 = vadd.f32 %v1029, %v1064
  %v1159 = vadd.f32 %v1030, %v1065
  %v1160 = vadd.f32 %v1031, %v1066
  %v1161 = vadd.f32 %v1032, %v1067
  %v1162 = vadd.f32 %v1033, %v1068
  %v1163 = vadd.f32 %v1034, %v1069
  %v1164 = vadd.f32 %v1097, %v1132
  %v1165 = vadd.f32 %v1098, %v1133
  %v1166 = vadd.f32 %v1099, %v1134
  %v1167 = vadd.f32 %v1100, %v1135
  %v1168 = vadd.f32 %v1101, %v1136
  %v1169 = vadd.f32 %v1102, %v1137
  %v1170 = vadd.f32 %v1103, %v1138
  %v1171 = vadd.f32 %v1104, %v1139
  %v1172 = vadd.f32 %v1140, %v1148
  %v1173 = vadd.f32 %v1141, %v1149
  %v1174 = vadd.f32 %v1142, %v1150
  %v1175 = vadd.f32 %v1143, %v1151
  %v1176 = vadd.f32 %v1144, %v1152
  %v1177 = vadd.f32 %v1145, %v1153
  %v1178 = vadd.f32 %v1146, %v1154
  %v1179 = vadd.f32 %v1147, %v1155
  %v1180 = vadd.f32 %v1156, %v1164
  %v1181 = vadd.f32 %v1157, %v1165
  %v1182 = vadd.f32 %v1158, %v1166
  %v1183 = vadd.f32 %v1159, %v1167
  %v1184 = vadd.f32 %v1160, %v1168
  %v1185 = vadd.f32 %v1161, %v1169
  %v1186 = vadd.f32 %v1162, %v1170
  %v1187 = vadd.f32 %v1163, %v1171
  %v1188 = vadd.f32 %v1172, %v1180
  %v1189 = vadd.f32 %v1173, %v1181
  %v1190 = vadd.f32 %v1174, %v1182
  %v1191 = vadd.f32 %v1175, %v1183
  %v1192 = vadd.f32 %v1176, %v1184
  %v1193 = vadd.f32 %v1177, %v1185
  %v1194 = vadd.f32 %v1178, %v1186
  %v1195 = vadd.f32 %v1179, %v1187
  %v1196 = vstv %s106
  %v1197 = vadd.f32 %v1188, %v1196
  %v1198 = vadd.f32 %v1189, %v1196
  %v1199 = vadd.f32 %v1190, %v1196
  %v1200 = vadd.f32 %v1191, %v1196
  %v1201 = vadd.f32 %v1192, %v1196
  %v1202 = vadd.f32 %v1193, %v1196
  %v1203 = vadd.f32 %v1194, %v1196
  %v1204 = vadd.f32 %v1195, %v1196
  %v1205 = vadd.f32 %v842, %v1197
  %v1206 = vadd.f32 %v843, %v1198
  %v1207 = vadd.f32 %v844, %v1199
  %v1208 = vadd.f32 %v845, %v1200
  %v1209 = vadd.f32 %v846, %v1201
  %v1210 = vadd.f32 %v847, %v1202
  %v1211 = vadd.f32 %v848, %v1203
  %v1212 = vadd.f32 %v849, %v1204
  %s1213 = smul.addr %s107, 8
  %s1214 = scalar_lea.vmem %s4, %s1213
  %1215 = vst [vmem:[%s1214] sm:$0xff] %v1205
  %1216 = vst [vmem:[%s1214 + $0x8] sm:$0xff] %v1206
  %1217 = vst [vmem:[%s1214 + $0x10] sm:$0xff] %v1207
  %1218 = vst [vmem:[%s1214 + $0x18] sm:$0xff] %v1208
  %1219 = vst [vmem:[%s1214 + $0x20] sm:$0xff] %v1209
  %1220 = vst [vmem:[%s1214 + $0x28] sm:$0xff] %v1210
  %1221 = vst [vmem:[%s1214 + $0x30] sm:$0xff] %v1211
  %1222 = vst [vmem:[%s1214 + $0x38] sm:$0xff] %v1212
  // Predicated region
  $region14: #{wcm_forward.1} parent=0 // pred_check
    _
  $region15: #{wcm_forward.1} parent=0 // pred_check_branch
    %1224 = sbr.rel (0) target = $region17
  $region16: #{wcm_forward.1} parent=0 // pred_region
    _
  $region17: #{wcm_forward.1} parent=0 // pred_fallthru
    _
  // Predicated region
  $region18: #{wcm_forward.1} parent=0 // pred_check
    _
  $region19: #{wcm_forward.1} parent=0 // pred_check_branch
    %1226 = sbr.rel (0) target = $region21
  $region20: #{wcm_forward.1} parent=0 // pred_region
    _
  $region21: #{wcm_forward.1} parent=0 // pred_fallthru
    _

</llo_original>
